<compile_context>
chip_gen: v5e
topology: v5e:2x2
jax: 0.10.0
libtpu: 0.0.40
codegen_flags: <defaults>
</compile_context>

<pallas_src>
import jax
import jax.numpy as jnp
from jax.experimental import pallas as pl
from jax.experimental.pallas import tpu as pltpu


def _gru_kernel(
    zs_ref,    # (T, BH)    f32 flattened inputs (batch folded into lanes)
    h0_ref,    # (1, BH)    f32 flattened initial hidden state
    wih_ref,   # (BH, 3BH)  bf16 kron-packed input->gate weights (x @ W layout)
    whh_ref,   # (BH, 3BH)  bf16 kron-packed hidden->gate weights
    b_ref,     # (1, 3BH)   f32 fused r/z/n biases (b_ir+b_hr | b_iz+b_hz | b_in)
    bhn_ref,   # (1, BH)    f32 hidden-side n-gate bias (kept separate: r*(h@Whn+bhn))
    out_ref,   # (T, BH)    h_t for every timestep (lane-dense rows)
):
    T, BH = out_ref.shape

    wih = wih_ref[...]                                    # bf16, loaded once
    whh = whh_ref[...]                                    # bf16, loaded once
    bhn = bhn_ref[...]                                    # (1, BH) f32

    # Prologue: batched input-side projection for all timesteps at once
    # (off the serial recurrence path).  bf16 MXU operands, f32 accumulation.
    xp = jnp.dot(zs_ref[...].astype(jnp.bfloat16), wih,
                 preferred_element_type=jnp.float32) + b_ref[...]   # (T, 3BH) f32

    h = h0_ref[...]                                       # (1, BH) f32 carry

    # T is static and small -> fully unrolled serial recurrence: one bf16 MXU
    # matmul + f32 elementwise gates per step; every gate slice is a full
    # 128-lane group, every store is a lane-dense (1, BH) row.
    for t in range(T):
        hp = jnp.dot(h.astype(jnp.bfloat16), whh,
                     preferred_element_type=jnp.float32)             # (1, 3BH)
        xt = xp[t:t + 1, :]                                           # (1, 3BH)

        r = jax.nn.sigmoid(xt[:, 0:BH] + hp[:, 0:BH])
        z = jax.nn.sigmoid(xt[:, BH:2 * BH] + hp[:, BH:2 * BH])
        n = jnp.tanh(xt[:, 2 * BH:3 * BH] + r * (hp[:, 2 * BH:3 * BH] + bhn))
        h = (1.0 - z) * n + z * h

        out_ref[pl.ds(t, 1), :] = h.astype(out_ref.dtype)


@jax.jit
def euler_forward(zs, h0, params):
    """GRU forward (the Euler.forward hot path).  zs: (T, B, H), h0: (1, B, H)."""
    T, B, H = zs.shape
    w_ih_big, w_hh_big, b_big, b_hn_big = params
    BH = B * H

    zs_flat = zs.reshape(T, BH)       # free layout change: batch folded into lanes
    h0_flat = h0.reshape(1, BH)

    out = pl.pallas_call(
        _gru_kernel,
        out_shape=jax.ShapeDtypeStruct((T, BH), zs.dtype),
        grid_spec=pltpu.PrefetchScalarGridSpec(
            num_scalar_prefetch=0,
            grid=(1,),                                    # single invocation; loop in-kernel
            in_specs=[
                pl.BlockSpec((T, BH), lambda i: (0, 0)),        # zs (flattened)
                pl.BlockSpec((1, BH), lambda i: (0, 0)),        # h0 (flattened)
                pl.BlockSpec((BH, 3 * BH), lambda i: (0, 0)),   # W_ih (kron-packed, bf16)
                pl.BlockSpec((BH, 3 * BH), lambda i: (0, 0)),   # W_hh (kron-packed, bf16)
                pl.BlockSpec((1, 3 * BH), lambda i: (0, 0)),    # fused biases
                pl.BlockSpec((1, BH), lambda i: (0, 0)),        # hidden-side n bias
            ],
            out_specs=pl.BlockSpec((T, BH), lambda i: (0, 0)),
        ),
        compiler_params=pltpu.CompilerParams(
            dimension_semantics=("arbitrary",),
        ),
    )(zs_flat, h0_flat, w_ih_big, w_hh_big, b_big, b_hn_big)

    out3 = out.reshape(T, B, H)
    return out3, out3[-1:]            # hn is identical to out[T-1]; no extra writeback


def make_gru_params(key, hidden):
    """Raw PyTorch-style GRU parameters (uniform(-1/sqrt(H), 1/sqrt(H)))."""
    k = 1.0 / jnp.sqrt(hidden)
    keys = jax.random.split(key, 4)
    w_ih = jax.random.uniform(keys[0], (3 * hidden, hidden), jnp.float32, -k, k)
    w_hh = jax.random.uniform(keys[1], (3 * hidden, hidden), jnp.float32, -k, k)
    b_ih = jax.random.uniform(keys[2], (3 * hidden,), jnp.float32, -k, k)
    b_hh = jax.random.uniform(keys[3], (3 * hidden,), jnp.float32, -k, k)
    return w_ih, w_hh, b_ih, b_hh


def prepare_params(raw, hidden, batch):
    """Fuse + lane-pack PyTorch GRU params for the lane-dense kernel.

    Gate order r, z, n.  Batch is folded into lanes: each gate occupies a full
    B*H = 128-lane group and the weights are block-diagonal over batch
    (kron(I_B, W_gate^T)).  r/z hidden biases are folded into the fused bias;
    b_hn stays separate because of the r * (h @ Whn + b_hn) term.  Weights are
    stored in bf16 for native MXU operands; biases stay f32.
    """
    w_ih, w_hh, b_ih, b_hh = raw
    H, B = hidden, batch
    eye_b = jnp.eye(B, dtype=jnp.float32)

    def pack(w):
        # per-gate x @ W layout = w[gate].T (H_in, H_out); block-diag over batch,
        # gate groups concatenated along lanes -> (B*H, 3*B*H)
        return jnp.concatenate(
            [jnp.kron(eye_b, w[g * H:(g + 1) * H, :].T) for g in range(3)], axis=1)

    w_ih_big = pack(w_ih).astype(jnp.bfloat16)
    w_hh_big = pack(w_hh).astype(jnp.bfloat16)

    b_big = jnp.concatenate([
        jnp.tile(b_ih[0:H] + b_hh[0:H], B),              # r: b_ir + b_hr
        jnp.tile(b_ih[H:2 * H] + b_hh[H:2 * H], B),      # z: b_iz + b_hz
        jnp.tile(b_ih[2 * H:3 * H], B),                  # n: b_in only
    ]).reshape(1, 3 * B * H).astype(jnp.float32)
    b_hn_big = jnp.tile(b_hh[2 * H:3 * H], B).reshape(1, B * H).astype(jnp.float32)
    return w_ih_big, w_hh_big, b_big, b_hn_big


def gru_reference(zs, h0, raw):
    """Pure-JAX f32 reference of the same GRU (raw unfused params)."""
    w_ih, w_hh, b_ih, b_hh = raw
    H = h0.shape[-1]
    wir, wiz, win = w_ih[:H].T, w_ih[H:2 * H].T, w_ih[2 * H:].T
    whr, whz, whn = w_hh[:H].T, w_hh[H:2 * H].T, w_hh[2 * H:].T
    bir, biz, bin_ = b_ih[:H], b_ih[H:2 * H], b_ih[2 * H:]
    bhr, bhz, bhn = b_hh[:H], b_hh[H:2 * H], b_hh[2 * H:]

    def step(h, x):
        r = jax.nn.sigmoid(x @ wir + bir + h @ whr + bhr)
        z = jax.nn.sigmoid(x @ wiz + biz + h @ whz + bhz)
        n = jnp.tanh(x @ win + bin_ + r * (h @ whn + bhn))
        h_new = (1.0 - z) * n + z * h
        return h_new, h_new

    hT, ys = jax.lax.scan(step, h0[0], zs)
    return ys, hT[None]


if __name__ == "__main__":
    T, B, H = 8, 4, 32   # seq len (concatenated worker outputs), batch, hidden
    key = jax.random.PRNGKey(0)
    k_x, k_h, k_p = jax.random.split(key, 3)

    zs = jax.random.normal(k_x, (T, B, H), jnp.float32)
    h0 = jax.random.normal(k_h, (1, B, H), jnp.float32)
    raw = make_gru_params(k_p, H)
    params = prepare_params(raw, H, B)

    out, hn = euler_forward(zs, h0, params)
    out = jax.block_until_ready(out)
    hn = jax.block_until_ready(hn)

    ref_out, ref_hn = gru_reference(zs, h0, raw)
    assert out.shape == (T, B, H) and hn.shape == (1, B, H)
    # bf16 MXU operands (f32 accumulate / f32 gate math) -> loosened tolerance.
    assert jnp.allclose(out, ref_out, atol=2e-2, rtol=2e-2)
    assert jnp.allclose(hn, ref_hn, atol=2e-2, rtol=2e-2)

    print("KERNEL_OK")
</pallas_src>

<mosaic_0001>
module attributes {stable_mosaic.version = 11 : i64} {
  func.func @_gru_kernel(%arg0: i32, %arg1: memref<8x128xf32, #tpu.memory_space<vmem>>, %arg2: memref<1x128xf32, #tpu.memory_space<vmem>>, %arg3: memref<128x384xbf16, #tpu.memory_space<vmem>>, %arg4: memref<128x384xbf16, #tpu.memory_space<vmem>>, %arg5: memref<1x384xf32, #tpu.memory_space<vmem>>, %arg6: memref<1x128xf32, #tpu.memory_space<vmem>>, %arg7: memref<8x128xf32, #tpu.memory_space<vmem>>) attributes {dimension_semantics = [#tpu.dimension_semantics<arbitrary>], iteration_bounds = array<i64: 1>, scalar_prefetch = 0 : i64, scratch_operands = 0 : i64, tpu.core_type = #tpu.core_type<tc>, window_params = [{pipeline_mode = #tpu.pipeline_mode<synchronous>, transform_indices = @transform_0, window_bounds = array<i64: 8, 128>}, {pipeline_mode = #tpu.pipeline_mode<synchronous>, transform_indices = @transform_1, window_bounds = array<i64: 1, 128>}, {pipeline_mode = #tpu.pipeline_mode<synchronous>, transform_indices = @transform_2, window_bounds = array<i64: 128, 384>}, {pipeline_mode = #tpu.pipeline_mode<synchronous>, transform_indices = @transform_3, window_bounds = array<i64: 128, 384>}, {pipeline_mode = #tpu.pipeline_mode<synchronous>, transform_indices = @transform_4, window_bounds = array<i64: 1, 384>}, {pipeline_mode = #tpu.pipeline_mode<synchronous>, transform_indices = @transform_5, window_bounds = array<i64: 1, 128>}, {pipeline_mode = #tpu.pipeline_mode<synchronous>, transform_indices = @transform_6, window_bounds = array<i64: 8, 128>}]} {
    %c0 = arith.constant 0 : index
    %c0_0 = arith.constant 0 : index
    %0 = vector.load %arg3[%c0, %c0_0] : memref<128x384xbf16, #tpu.memory_space<vmem>>, vector<128x384xbf16>
    %c0_1 = arith.constant 0 : index
    %c0_2 = arith.constant 0 : index
    %1 = vector.load %arg4[%c0_1, %c0_2] : memref<128x384xbf16, #tpu.memory_space<vmem>>, vector<128x384xbf16>
    %c0_3 = arith.constant 0 : index
    %c0_4 = arith.constant 0 : index
    %2 = vector.load %arg6[%c0_3, %c0_4] : memref<1x128xf32, #tpu.memory_space<vmem>>, vector<1x128xf32>
    %c0_5 = arith.constant 0 : index
    %c0_6 = arith.constant 0 : index
    %3 = vector.load %arg1[%c0_5, %c0_6] : memref<8x128xf32, #tpu.memory_space<vmem>>, vector<8x128xf32>
    %4 = arith.truncf %3 : vector<8x128xf32> to vector<8x128xbf16>
    %cst = arith.constant dense<0.000000e+00> : vector<8x384xf32>
    %5 = tpu.matmul %4, %0, %cst {dimension_numbers = #tpu.dot_dimension_numbers<[1], [0], [0], [1], [0, 0, 1, 1], [], []>} : vector<8x128xbf16>, vector<128x384xbf16>, vector<8x384xf32> -> vector<8x384xf32>
    %c0_7 = arith.constant 0 : index
    %c0_8 = arith.constant 0 : index
    %6 = vector.load %arg5[%c0_7, %c0_8] : memref<1x384xf32, #tpu.memory_space<vmem>>, vector<1x384xf32>
    %7 = vector.broadcast %6 : vector<1x384xf32> to vector<8x384xf32>
    %8 = arith.addf %5, %7 : vector<8x384xf32>
    %c0_9 = arith.constant 0 : index
    %c0_10 = arith.constant 0 : index
    %9 = vector.load %arg2[%c0_9, %c0_10] : memref<1x128xf32, #tpu.memory_space<vmem>>, vector<1x128xf32>
    %10 = arith.truncf %9 : vector<1x128xf32> to vector<1x128xbf16>
    %cst_11 = arith.constant dense<0.000000e+00> : vector<1x384xf32>
    %11 = tpu.matmul %10, %1, %cst_11 {dimension_numbers = #tpu.dot_dimension_numbers<[1], [0], [0], [1], [0, 0, 1, 1], [], []>} : vector<1x128xbf16>, vector<128x384xbf16>, vector<1x384xf32> -> vector<1x384xf32>
    %12 = vector.extract_strided_slice %8 {offsets = [0, 0], sizes = [1, 384], strides = [1, 1]} : vector<8x384xf32> to vector<1x384xf32>
    %13 = vector.extract_strided_slice %12 {offsets = [0, 0], sizes = [1, 128], strides = [1, 1]} : vector<1x384xf32> to vector<1x128xf32>
    %14 = vector.extract_strided_slice %11 {offsets = [0, 0], sizes = [1, 128], strides = [1, 1]} : vector<1x384xf32> to vector<1x128xf32>
    %15 = arith.addf %13, %14 : vector<1x128xf32>
    %16 = arith.negf %15 : vector<1x128xf32>
    %17 = math.exp %16 : vector<1x128xf32>
    %cst_12 = arith.constant 1.000000e+00 : f32
    %18 = vector.broadcast %cst_12 : f32 to vector<1x128xf32>
    %19 = arith.addf %18, %17 : vector<1x128xf32>
    %20 = arith.divf %18, %19 : vector<1x128xf32>
    %21 = vector.extract_strided_slice %12 {offsets = [0, 128], sizes = [1, 128], strides = [1, 1]} : vector<1x384xf32> to vector<1x128xf32>
    %22 = vector.extract_strided_slice %11 {offsets = [0, 128], sizes = [1, 128], strides = [1, 1]} : vector<1x384xf32> to vector<1x128xf32>
    %23 = arith.addf %21, %22 : vector<1x128xf32>
    %24 = arith.negf %23 : vector<1x128xf32>
    %25 = math.exp %24 : vector<1x128xf32>
    %cst_13 = arith.constant 1.000000e+00 : f32
    %26 = vector.broadcast %cst_13 : f32 to vector<1x128xf32>
    %27 = arith.addf %26, %25 : vector<1x128xf32>
    %28 = arith.divf %26, %27 : vector<1x128xf32>
    %29 = vector.extract_strided_slice %12 {offsets = [0, 256], sizes = [1, 128], strides = [1, 1]} : vector<1x384xf32> to vector<1x128xf32>
    %30 = vector.extract_strided_slice %11 {offsets = [0, 256], sizes = [1, 128], strides = [1, 1]} : vector<1x384xf32> to vector<1x128xf32>
    %31 = arith.addf %30, %2 : vector<1x128xf32>
    %32 = arith.mulf %20, %31 : vector<1x128xf32>
    %33 = arith.addf %29, %32 : vector<1x128xf32>
    %34 = math.tanh %33 : vector<1x128xf32>
    %cst_14 = arith.constant 1.000000e+00 : f32
    %35 = vector.broadcast %cst_14 : f32 to vector<1x128xf32>
    %36 = arith.subf %35, %28 : vector<1x128xf32>
    %37 = arith.mulf %36, %34 : vector<1x128xf32>
    %38 = arith.mulf %28, %9 : vector<1x128xf32>
    %39 = arith.addf %37, %38 : vector<1x128xf32>
    %c0_15 = arith.constant 0 : index
    %c0_16 = arith.constant 0 : index
    %40 = vector.load %arg7[%c0_15, %c0_16] : memref<8x128xf32, #tpu.memory_space<vmem>>, vector<1x128xf32>
    tpu.vector_store %arg7[%c0_15, %c0_16], %39 {strides = array<i32>} : memref<8x128xf32, #tpu.memory_space<vmem>>, vector<1x128xf32>,
    %41 = arith.truncf %39 : vector<1x128xf32> to vector<1x128xbf16>
    %cst_17 = arith.constant dense<0.000000e+00> : vector<1x384xf32>
    %42 = tpu.matmul %41, %1, %cst_17 {dimension_numbers = #tpu.dot_dimension_numbers<[1], [0], [0], [1], [0, 0, 1, 1], [], []>} : vector<1x128xbf16>, vector<128x384xbf16>, vector<1x384xf32> -> vector<1x384xf32>
    %43 = vector.extract_strided_slice %8 {offsets = [1, 0], sizes = [1, 384], strides = [1, 1]} : vector<8x384xf32> to vector<1x384xf32>
    %44 = vector.extract_strided_slice %43 {offsets = [0, 0], sizes = [1, 128], strides = [1, 1]} : vector<1x384xf32> to vector<1x128xf32>
    %45 = vector.extract_strided_slice %42 {offsets = [0, 0], sizes = [1, 128], strides = [1, 1]} : vector<1x384xf32> to vector<1x128xf32>
    %46 = arith.addf %44, %45 : vector<1x128xf32>
    %47 = arith.negf %46 : vector<1x128xf32>
    %48 = math.exp %47 : vector<1x128xf32>
    %cst_18 = arith.constant 1.000000e+00 : f32
    %49 = vector.broadcast %cst_18 : f32 to vector<1x128xf32>
    %50 = arith.addf %49, %48 : vector<1x128xf32>
    %51 = arith.divf %49, %50 : vector<1x128xf32>
    %52 = vector.extract_strided_slice %43 {offsets = [0, 128], sizes = [1, 128], strides = [1, 1]} : vector<1x384xf32> to vector<1x128xf32>
    %53 = vector.extract_strided_slice %42 {offsets = [0, 128], sizes = [1, 128], strides = [1, 1]} : vector<1x384xf32> to vector<1x128xf32>
    %54 = arith.addf %52, %53 : vector<1x128xf32>
    %55 = arith.negf %54 : vector<1x128xf32>
    %56 = math.exp %55 : vector<1x128xf32>
    %cst_19 = arith.constant 1.000000e+00 : f32
    %57 = vector.broadcast %cst_19 : f32 to vector<1x128xf32>
    %58 = arith.addf %57, %56 : vector<1x128xf32>
    %59 = arith.divf %57, %58 : vector<1x128xf32>
    %60 = vector.extract_strided_slice %43 {offsets = [0, 256], sizes = [1, 128], strides = [1, 1]} : vector<1x384xf32> to vector<1x128xf32>
    %61 = vector.extract_strided_slice %42 {offsets = [0, 256], sizes = [1, 128], strides = [1, 1]} : vector<1x384xf32> to vector<1x128xf32>
    %62 = arith.addf %61, %2 : vector<1x128xf32>
    %63 = arith.mulf %51, %62 : vector<1x128xf32>
    %64 = arith.addf %60, %63 : vector<1x128xf32>
    %65 = math.tanh %64 : vector<1x128xf32>
    %cst_20 = arith.constant 1.000000e+00 : f32
    %66 = vector.broadcast %cst_20 : f32 to vector<1x128xf32>
    %67 = arith.subf %66, %59 : vector<1x128xf32>
    %68 = arith.mulf %67, %65 : vector<1x128xf32>
    %69 = arith.mulf %59, %39 : vector<1x128xf32>
    %70 = arith.addf %68, %69 : vector<1x128xf32>
    %c1 = arith.constant 1 : index
    %c0_21 = arith.constant 0 : index
    %71 = vector.load %arg7[%c1, %c0_21] : memref<8x128xf32, #tpu.memory_space<vmem>>, vector<1x128xf32>
    tpu.vector_store %arg7[%c1, %c0_21], %70 {strides = array<i32>} : memref<8x128xf32, #tpu.memory_space<vmem>>, vector<1x128xf32>,
    %72 = arith.truncf %70 : vector<1x128xf32> to vector<1x128xbf16>
    %cst_22 = arith.constant dense<0.000000e+00> : vector<1x384xf32>
    %73 = tpu.matmul %72, %1, %cst_22 {dimension_numbers = #tpu.dot_dimension_numbers<[1], [0], [0], [1], [0, 0, 1, 1], [], []>} : vector<1x128xbf16>, vector<128x384xbf16>, vector<1x384xf32> -> vector<1x384xf32>
    %74 = vector.extract_strided_slice %8 {offsets = [2, 0], sizes = [1, 384], strides = [1, 1]} : vector<8x384xf32> to vector<1x384xf32>
    %75 = vector.extract_strided_slice %74 {offsets = [0, 0], sizes = [1, 128], strides = [1, 1]} : vector<1x384xf32> to vector<1x128xf32>
    %76 = vector.extract_strided_slice %73 {offsets = [0, 0], sizes = [1, 128], strides = [1, 1]} : vector<1x384xf32> to vector<1x128xf32>
    %77 = arith.addf %75, %76 : vector<1x128xf32>
    %78 = arith.negf %77 : vector<1x128xf32>
    %79 = math.exp %78 : vector<1x128xf32>
    %cst_23 = arith.constant 1.000000e+00 : f32
    %80 = vector.broadcast %cst_23 : f32 to vector<1x128xf32>
    %81 = arith.addf %80, %79 : vector<1x128xf32>
    %82 = arith.divf %80, %81 : vector<1x128xf32>
    %83 = vector.extract_strided_slice %74 {offsets = [0, 128], sizes = [1, 128], strides = [1, 1]} : vector<1x384xf32> to vector<1x128xf32>
    %84 = vector.extract_strided_slice %73 {offsets = [0, 128], sizes = [1, 128], strides = [1, 1]} : vector<1x384xf32> to vector<1x128xf32>
    %85 = arith.addf %83, %84 : vector<1x128xf32>
    %86 = arith.negf %85 : vector<1x128xf32>
    %87 = math.exp %86 : vector<1x128xf32>
    %cst_24 = arith.constant 1.000000e+00 : f32
    %88 = vector.broadcast %cst_24 : f32 to vector<1x128xf32>
    %89 = arith.addf %88, %87 : vector<1x128xf32>
    %90 = arith.divf %88, %89 : vector<1x128xf32>
    %91 = vector.extract_strided_slice %74 {offsets = [0, 256], sizes = [1, 128], strides = [1, 1]} : vector<1x384xf32> to vector<1x128xf32>
    %92 = vector.extract_strided_slice %73 {offsets = [0, 256], sizes = [1, 128], strides = [1, 1]} : vector<1x384xf32> to vector<1x128xf32>
    %93 = arith.addf %92, %2 : vector<1x128xf32>
    %94 = arith.mulf %82, %93 : vector<1x128xf32>
    %95 = arith.addf %91, %94 : vector<1x128xf32>
    %96 = math.tanh %95 : vector<1x128xf32>
    %cst_25 = arith.constant 1.000000e+00 : f32
    %97 = vector.broadcast %cst_25 : f32 to vector<1x128xf32>
    %98 = arith.subf %97, %90 : vector<1x128xf32>
    %99 = arith.mulf %98, %96 : vector<1x128xf32>
    %100 = arith.mulf %90, %70 : vector<1x128xf32>
    %101 = arith.addf %99, %100 : vector<1x128xf32>
    %c2 = arith.constant 2 : index
    %c0_26 = arith.constant 0 : index
    %102 = vector.load %arg7[%c2, %c0_26] : memref<8x128xf32, #tpu.memory_space<vmem>>, vector<1x128xf32>
    tpu.vector_store %arg7[%c2, %c0_26], %101 {strides = array<i32>} : memref<8x128xf32, #tpu.memory_space<vmem>>, vector<1x128xf32>,
    %103 = arith.truncf %101 : vector<1x128xf32> to vector<1x128xbf16>
    %cst_27 = arith.constant dense<0.000000e+00> : vector<1x384xf32>
    %104 = tpu.matmul %103, %1, %cst_27 {dimension_numbers = #tpu.dot_dimension_numbers<[1], [0], [0], [1], [0, 0, 1, 1], [], []>} : vector<1x128xbf16>, vector<128x384xbf16>, vector<1x384xf32> -> vector<1x384xf32>
    %105 = vector.extract_strided_slice %8 {offsets = [3, 0], sizes = [1, 384], strides = [1, 1]} : vector<8x384xf32> to vector<1x384xf32>
    %106 = vector.extract_strided_slice %105 {offsets = [0, 0], sizes = [1, 128], strides = [1, 1]} : vector<1x384xf32> to vector<1x128xf32>
    %107 = vector.extract_strided_slice %104 {offsets = [0, 0], sizes = [1, 128], strides = [1, 1]} : vector<1x384xf32> to vector<1x128xf32>
    %108 = arith.addf %106, %107 : vector<1x128xf32>
    %109 = arith.negf %108 : vector<1x128xf32>
    %110 = math.exp %109 : vector<1x128xf32>
    %cst_28 = arith.constant 1.000000e+00 : f32
    %111 = vector.broadcast %cst_28 : f32 to vector<1x128xf32>
    %112 = arith.addf %111, %110 : vector<1x128xf32>
    %113 = arith.divf %111, %112 : vector<1x128xf32>
    %114 = vector.extract_strided_slice %105 {offsets = [0, 128], sizes = [1, 128], strides = [1, 1]} : vector<1x384xf32> to vector<1x128xf32>
    %115 = vector.extract_strided_slice %104 {offsets = [0, 128], sizes = [1, 128], strides = [1, 1]} : vector<1x384xf32> to vector<1x128xf32>
    %116 = arith.addf %114, %115 : vector<1x128xf32>
    %117 = arith.negf %116 : vector<1x128xf32>
    %118 = math.exp %117 : vector<1x128xf32>
    %cst_29 = arith.constant 1.000000e+00 : f32
    %119 = vector.broadcast %cst_29 : f32 to vector<1x128xf32>
    %120 = arith.addf %119, %118 : vector<1x128xf32>
    %121 = arith.divf %119, %120 : vector<1x128xf32>
    %122 = vector.extract_strided_slice %105 {offsets = [0, 256], sizes = [1, 128], strides = [1, 1]} : vector<1x384xf32> to vector<1x128xf32>
    %123 = vector.extract_strided_slice %104 {offsets = [0, 256], sizes = [1, 128], strides = [1, 1]} : vector<1x384xf32> to vector<1x128xf32>
    %124 = arith.addf %123, %2 : vector<1x128xf32>
    %125 = arith.mulf %113, %124 : vector<1x128xf32>
    %126 = arith.addf %122, %125 : vector<1x128xf32>
    %127 = math.tanh %126 : vector<1x128xf32>
    %cst_30 = arith.constant 1.000000e+00 : f32
    %128 = vector.broadcast %cst_30 : f32 to vector<1x128xf32>
    %129 = arith.subf %128, %121 : vector<1x128xf32>
    %130 = arith.mulf %129, %127 : vector<1x128xf32>
    %131 = arith.mulf %121, %101 : vector<1x128xf32>
    %132 = arith.addf %130, %131 : vector<1x128xf32>
    %c3 = arith.constant 3 : index
    %c0_31 = arith.constant 0 : index
    %133 = vector.load %arg7[%c3, %c0_31] : memref<8x128xf32, #tpu.memory_space<vmem>>, vector<1x128xf32>
    tpu.vector_store %arg7[%c3, %c0_31], %132 {strides = array<i32>} : memref<8x128xf32, #tpu.memory_space<vmem>>, vector<1x128xf32>,
    %134 = arith.truncf %132 : vector<1x128xf32> to vector<1x128xbf16>
    %cst_32 = arith.constant dense<0.000000e+00> : vector<1x384xf32>
    %135 = tpu.matmul %134, %1, %cst_32 {dimension_numbers = #tpu.dot_dimension_numbers<[1], [0], [0], [1], [0, 0, 1, 1], [], []>} : vector<1x128xbf16>, vector<128x384xbf16>, vector<1x384xf32> -> vector<1x384xf32>
    %136 = vector.extract_strided_slice %8 {offsets = [4, 0], sizes = [1, 384], strides = [1, 1]} : vector<8x384xf32> to vector<1x384xf32>
    %137 = vector.extract_strided_slice %136 {offsets = [0, 0], sizes = [1, 128], strides = [1, 1]} : vector<1x384xf32> to vector<1x128xf32>
    %138 = vector.extract_strided_slice %135 {offsets = [0, 0], sizes = [1, 128], strides = [1, 1]} : vector<1x384xf32> to vector<1x128xf32>
    %139 = arith.addf %137, %138 : vector<1x128xf32>
    %140 = arith.negf %139 : vector<1x128xf32>
    %141 = math.exp %140 : vector<1x128xf32>
    %cst_33 = arith.constant 1.000000e+00 : f32
    %142 = vector.broadcast %cst_33 : f32 to vector<1x128xf32>
    %143 = arith.addf %142, %141 : vector<1x128xf32>
    %144 = arith.divf %142, %143 : vector<1x128xf32>
    %145 = vector.extract_strided_slice %136 {offsets = [0, 128], sizes = [1, 128], strides = [1, 1]} : vector<1x384xf32> to vector<1x128xf32>
    %146 = vector.extract_strided_slice %135 {offsets = [0, 128], sizes = [1, 128], strides = [1, 1]} : vector<1x384xf32> to vector<1x128xf32>
    %147 = arith.addf %145, %146 : vector<1x128xf32>
    %148 = arith.negf %147 : vector<1x128xf32>
    %149 = math.exp %148 : vector<1x128xf32>
    %cst_34 = arith.constant 1.000000e+00 : f32
    %150 = vector.broadcast %cst_34 : f32 to vector<1x128xf32>
    %151 = arith.addf %150, %149 : vector<1x128xf32>
    %152 = arith.divf %150, %151 : vector<1x128xf32>
    %153 = vector.extract_strided_slice %136 {offsets = [0, 256], sizes = [1, 128], strides = [1, 1]} : vector<1x384xf32> to vector<1x128xf32>
    %154 = vector.extract_strided_slice %135 {offsets = [0, 256], sizes = [1, 128], strides = [1, 1]} : vector<1x384xf32> to vector<1x128xf32>
    %155 = arith.addf %154, %2 : vector<1x128xf32>
    %156 = arith.mulf %144, %155 : vector<1x128xf32>
    %157 = arith.addf %153, %156 : vector<1x128xf32>
    %158 = math.tanh %157 : vector<1x128xf32>
    %cst_35 = arith.constant 1.000000e+00 : f32
    %159 = vector.broadcast %cst_35 : f32 to vector<1x128xf32>
    %160 = arith.subf %159, %152 : vector<1x128xf32>
    %161 = arith.mulf %160, %158 : vector<1x128xf32>
    %162 = arith.mulf %152, %132 : vector<1x128xf32>
    %163 = arith.addf %161, %162 : vector<1x128xf32>
    %c4 = arith.constant 4 : index
    %c0_36 = arith.constant 0 : index
    %164 = vector.load %arg7[%c4, %c0_36] : memref<8x128xf32, #tpu.memory_space<vmem>>, vector<1x128xf32>
    tpu.vector_store %arg7[%c4, %c0_36], %163 {strides = array<i32>} : memref<8x128xf32, #tpu.memory_space<vmem>>, vector<1x128xf32>,
    %165 = arith.truncf %163 : vector<1x128xf32> to vector<1x128xbf16>
    %cst_37 = arith.constant dense<0.000000e+00> : vector<1x384xf32>
    %166 = tpu.matmul %165, %1, %cst_37 {dimension_numbers = #tpu.dot_dimension_numbers<[1], [0], [0], [1], [0, 0, 1, 1], [], []>} : vector<1x128xbf16>, vector<128x384xbf16>, vector<1x384xf32> -> vector<1x384xf32>
    %167 = vector.extract_strided_slice %8 {offsets = [5, 0], sizes = [1, 384], strides = [1, 1]} : vector<8x384xf32> to vector<1x384xf32>
    %168 = vector.extract_strided_slice %167 {offsets = [0, 0], sizes = [1, 128], strides = [1, 1]} : vector<1x384xf32> to vector<1x128xf32>
    %169 = vector.extract_strided_slice %166 {offsets = [0, 0], sizes = [1, 128], strides = [1, 1]} : vector<1x384xf32> to vector<1x128xf32>
    %170 = arith.addf %168, %169 : vector<1x128xf32>
    %171 = arith.negf %170 : vector<1x128xf32>
    %172 = math.exp %171 : vector<1x128xf32>
    %cst_38 = arith.constant 1.000000e+00 : f32
    %173 = vector.broadcast %cst_38 : f32 to vector<1x128xf32>
    %174 = arith.addf %173, %172 : vector<1x128xf32>
    %175 = arith.divf %173, %174 : vector<1x128xf32>
    %176 = vector.extract_strided_slice %167 {offsets = [0, 128], sizes = [1, 128], strides = [1, 1]} : vector<1x384xf32> to vector<1x128xf32>
    %177 = vector.extract_strided_slice %166 {offsets = [0, 128], sizes = [1, 128], strides = [1, 1]} : vector<1x384xf32> to vector<1x128xf32>
    %178 = arith.addf %176, %177 : vector<1x128xf32>
    %179 = arith.negf %178 : vector<1x128xf32>
    %180 = math.exp %179 : vector<1x128xf32>
    %cst_39 = arith.constant 1.000000e+00 : f32
    %181 = vector.broadcast %cst_39 : f32 to vector<1x128xf32>
    %182 = arith.addf %181, %180 : vector<1x128xf32>
    %183 = arith.divf %181, %182 : vector<1x128xf32>
    %184 = vector.extract_strided_slice %167 {offsets = [0, 256], sizes = [1, 128], strides = [1, 1]} : vector<1x384xf32> to vector<1x128xf32>
    %185 = vector.extract_strided_slice %166 {offsets = [0, 256], sizes = [1, 128], strides = [1, 1]} : vector<1x384xf32> to vector<1x128xf32>
    %186 = arith.addf %185, %2 : vector<1x128xf32>
    %187 = arith.mulf %175, %186 : vector<1x128xf32>
    %188 = arith.addf %184, %187 : vector<1x128xf32>
    %189 = math.tanh %188 : vector<1x128xf32>
    %cst_40 = arith.constant 1.000000e+00 : f32
    %190 = vector.broadcast %cst_40 : f32 to vector<1x128xf32>
    %191 = arith.subf %190, %183 : vector<1x128xf32>
    %192 = arith.mulf %191, %189 : vector<1x128xf32>
    %193 = arith.mulf %183, %163 : vector<1x128xf32>
    %194 = arith.addf %192, %193 : vector<1x128xf32>
    %c5 = arith.constant 5 : index
    %c0_41 = arith.constant 0 : index
    %195 = vector.load %arg7[%c5, %c0_41] : memref<8x128xf32, #tpu.memory_space<vmem>>, vector<1x128xf32>
    tpu.vector_store %arg7[%c5, %c0_41], %194 {strides = array<i32>} : memref<8x128xf32, #tpu.memory_space<vmem>>, vector<1x128xf32>,
    %196 = arith.truncf %194 : vector<1x128xf32> to vector<1x128xbf16>
    %cst_42 = arith.constant dense<0.000000e+00> : vector<1x384xf32>
    %197 = tpu.matmul %196, %1, %cst_42 {dimension_numbers = #tpu.dot_dimension_numbers<[1], [0], [0], [1], [0, 0, 1, 1], [], []>} : vector<1x128xbf16>, vector<128x384xbf16>, vector<1x384xf32> -> vector<1x384xf32>
    %198 = vector.extract_strided_slice %8 {offsets = [6, 0], sizes = [1, 384], strides = [1, 1]} : vector<8x384xf32> to vector<1x384xf32>
    %199 = vector.extract_strided_slice %198 {offsets = [0, 0], sizes = [1, 128], strides = [1, 1]} : vector<1x384xf32> to vector<1x128xf32>
    %200 = vector.extract_strided_slice %197 {offsets = [0, 0], sizes = [1, 128], strides = [1, 1]} : vector<1x384xf32> to vector<1x128xf32>
    %201 = arith.addf %199, %200 : vector<1x128xf32>
    %202 = arith.negf %201 : vector<1x128xf32>
    %203 = math.exp %202 : vector<1x128xf32>
    %cst_43 = arith.constant 1.000000e+00 : f32
    %204 = vector.broadcast %cst_43 : f32 to vector<1x128xf32>
    %205 = arith.addf %204, %203 : vector<1x128xf32>
    %206 = arith.divf %204, %205 : vector<1x128xf32>
    %207 = vector.extract_strided_slice %198 {offsets = [0, 128], sizes = [1, 128], strides = [1, 1]} : vector<1x384xf32> to vector<1x128xf32>
    %208 = vector.extract_strided_slice %197 {offsets = [0, 128], sizes = [1, 128], strides = [1, 1]} : vector<1x384xf32> to vector<1x128xf32>
    %209 = arith.addf %207, %208 : vector<1x128xf32>
    %210 = arith.negf %209 : vector<1x128xf32>
    %211 = math.exp %210 : vector<1x128xf32>
    %cst_44 = arith.constant 1.000000e+00 : f32
    %212 = vector.broadcast %cst_44 : f32 to vector<1x128xf32>
    %213 = arith.addf %212, %211 : vector<1x128xf32>
    %214 = arith.divf %212, %213 : vector<1x128xf32>
    %215 = vector.extract_strided_slice %198 {offsets = [0, 256], sizes = [1, 128], strides = [1, 1]} : vector<1x384xf32> to vector<1x128xf32>
    %216 = vector.extract_strided_slice %197 {offsets = [0, 256], sizes = [1, 128], strides = [1, 1]} : vector<1x384xf32> to vector<1x128xf32>
    %217 = arith.addf %216, %2 : vector<1x128xf32>
    %218 = arith.mulf %206, %217 : vector<1x128xf32>
    %219 = arith.addf %215, %218 : vector<1x128xf32>
    %220 = math.tanh %219 : vector<1x128xf32>
    %cst_45 = arith.constant 1.000000e+00 : f32
    %221 = vector.broadcast %cst_45 : f32 to vector<1x128xf32>
    %222 = arith.subf %221, %214 : vector<1x128xf32>
    %223 = arith.mulf %222, %220 : vector<1x128xf32>
    %224 = arith.mulf %214, %194 : vector<1x128xf32>
    %225 = arith.addf %223, %224 : vector<1x128xf32>
    %c6 = arith.constant 6 : index
    %c0_46 = arith.constant 0 : index
    %226 = vector.load %arg7[%c6, %c0_46] : memref<8x128xf32, #tpu.memory_space<vmem>>, vector<1x128xf32>
    tpu.vector_store %arg7[%c6, %c0_46], %225 {strides = array<i32>} : memref<8x128xf32, #tpu.memory_space<vmem>>, vector<1x128xf32>,
    %227 = arith.truncf %225 : vector<1x128xf32> to vector<1x128xbf16>
    %cst_47 = arith.constant dense<0.000000e+00> : vector<1x384xf32>
    %228 = tpu.matmul %227, %1, %cst_47 {dimension_numbers = #tpu.dot_dimension_numbers<[1], [0], [0], [1], [0, 0, 1, 1], [], []>} : vector<1x128xbf16>, vector<128x384xbf16>, vector<1x384xf32> -> vector<1x384xf32>
    %229 = vector.extract_strided_slice %8 {offsets = [7, 0], sizes = [1, 384], strides = [1, 1]} : vector<8x384xf32> to vector<1x384xf32>
    %230 = vector.extract_strided_slice %229 {offsets = [0, 0], sizes = [1, 128], strides = [1, 1]} : vector<1x384xf32> to vector<1x128xf32>
    %231 = vector.extract_strided_slice %228 {offsets = [0, 0], sizes = [1, 128], strides = [1, 1]} : vector<1x384xf32> to vector<1x128xf32>
    %232 = arith.addf %230, %231 : vector<1x128xf32>
    %233 = arith.negf %232 : vector<1x128xf32>
    %234 = math.exp %233 : vector<1x128xf32>
    %cst_48 = arith.constant 1.000000e+00 : f32
    %235 = vector.broadcast %cst_48 : f32 to vector<1x128xf32>
    %236 = arith.addf %235, %234 : vector<1x128xf32>
    %237 = arith.divf %235, %236 : vector<1x128xf32>
    %238 = vector.extract_strided_slice %229 {offsets = [0, 128], sizes = [1, 128], strides = [1, 1]} : vector<1x384xf32> to vector<1x128xf32>
    %239 = vector.extract_strided_slice %228 {offsets = [0, 128], sizes = [1, 128], strides = [1, 1]} : vector<1x384xf32> to vector<1x128xf32>
    %240 = arith.addf %238, %239 : vector<1x128xf32>
    %241 = arith.negf %240 : vector<1x128xf32>
    %242 = math.exp %241 : vector<1x128xf32>
    %cst_49 = arith.constant 1.000000e+00 : f32
    %243 = vector.broadcast %cst_49 : f32 to vector<1x128xf32>
    %244 = arith.addf %243, %242 : vector<1x128xf32>
    %245 = arith.divf %243, %244 : vector<1x128xf32>
    %246 = vector.extract_strided_slice %229 {offsets = [0, 256], sizes = [1, 128], strides = [1, 1]} : vector<1x384xf32> to vector<1x128xf32>
    %247 = vector.extract_strided_slice %228 {offsets = [0, 256], sizes = [1, 128], strides = [1, 1]} : vector<1x384xf32> to vector<1x128xf32>
    %248 = arith.addf %247, %2 : vector<1x128xf32>
    %249 = arith.mulf %237, %248 : vector<1x128xf32>
    %250 = arith.addf %246, %249 : vector<1x128xf32>
    %251 = math.tanh %250 : vector<1x128xf32>
    %cst_50 = arith.constant 1.000000e+00 : f32
    %252 = vector.broadcast %cst_50 : f32 to vector<1x128xf32>
    %253 = arith.subf %252, %245 : vector<1x128xf32>
    %254 = arith.mulf %253, %251 : vector<1x128xf32>
    %255 = arith.mulf %245, %225 : vector<1x128xf32>
    %256 = arith.addf %254, %255 : vector<1x128xf32>
    %c7 = arith.constant 7 : index
    %c0_51 = arith.constant 0 : index
    %257 = vector.load %arg7[%c7, %c0_51] : memref<8x128xf32, #tpu.memory_space<vmem>>, vector<1x128xf32>
    tpu.vector_store %arg7[%c7, %c0_51], %256 {strides = array<i32>} : memref<8x128xf32, #tpu.memory_space<vmem>>, vector<1x128xf32>,
    return
  }
  func.func @transform_0(%arg0: i32) -> (i32, i32) {
    %c0_i32 = arith.constant 0 : i32
    %c0_i32_0 = arith.constant 0 : i32
    %c0_i32_1 = arith.constant 0 : i32
    return %c0_i32, %c0_i32_0 : i32, i32
  }
  func.func @transform_1(%arg0: i32) -> (i32, i32) {
    %c0_i32 = arith.constant 0 : i32
    %c0_i32_0 = arith.constant 0 : i32
    %c0_i32_1 = arith.constant 0 : i32
    return %c0_i32, %c0_i32_0 : i32, i32
  }
  func.func @transform_2(%arg0: i32) -> (i32, i32) {
    %c0_i32 = arith.constant 0 : i32
    %c0_i32_0 = arith.constant 0 : i32
    %c0_i32_1 = arith.constant 0 : i32
    return %c0_i32, %c0_i32_0 : i32, i32
  }
  func.func @transform_3(%arg0: i32) -> (i32, i32) {
    %c0_i32 = arith.constant 0 : i32
    %c0_i32_0 = arith.constant 0 : i32
    %c0_i32_1 = arith.constant 0 : i32
    return %c0_i32, %c0_i32_0 : i32, i32
  }
  func.func @transform_4(%arg0: i32) -> (i32, i32) {
    %c0_i32 = arith.constant 0 : i32
    %c0_i32_0 = arith.constant 0 : i32
    %c0_i32_1 = arith.constant 0 : i32
    return %c0_i32, %c0_i32_0 : i32, i32
  }
  func.func @transform_5(%arg0: i32) -> (i32, i32) {
    %c0_i32 = arith.constant 0 : i32
    %c0_i32_0 = arith.constant 0 : i32
    %c0_i32_1 = arith.constant 0 : i32
    return %c0_i32, %c0_i32_0 : i32, i32
  }
  func.func @transform_6(%arg0: i32) -> (i32, i32) {
    %c0_i32 = arith.constant 0 : i32
    %c0_i32_0 = arith.constant 0 : i32
    %c0_i32_1 = arith.constant 0 : i32
    return %c0_i32, %c0_i32_0 : i32, i32
  }
}

</mosaic_0001>

<llo_original>
// kernel: euler_forward.1
$region0: #{euler_forward.1}
  #allocation0 [shape = 'u32[]', space=smem, size = 0x4, offset = 0x4, fixed_abs, tag = 'smem constant byte address 0x4 - core index']
  #allocation1 [shape = 'u32[72,128]{1,0:T(1,128)}', space=vmem, size = 0x9000, scoped, tag = 'internal scratch']
  %s0 = inlined_call_operand.vmem [shape: f32[8,128], index: 0, kind: input, shape index: {}]
  %s1 = inlined_call_operand.vmem [shape: f32[1,128], index: 1, kind: input, shape index: {}]
  %s2 = inlined_call_operand.hbm [shape: bf16[128,384], index: 2, kind: input, shape index: {}]
  %s3 = inlined_call_operand.hbm [shape: bf16[128,384], index: 3, kind: input, shape index: {}]
  %s4 = inlined_call_operand.vmem [shape: f32[1,384], index: 4, kind: input, shape index: {}]
  %s5 = inlined_call_operand.vmem [shape: f32[1,128], index: 5, kind: input, shape index: {}]
  %s6 = inlined_call_operand.vmem [shape: f32[8,128], index: 6, kind: output, shape index: {}]
  %s7 = sld [smem:[#allocation0]]
  $region42: #{euler_forward.1} parent=0
    _
  %s9 = ssub.s32 1, %s7
  %s10 = scalar_select 0, %s9, %s7
  $region1: #{euler_forward.1} parent=0
    #allocation2 [shape = 'u8[98304]{0}', space=vmem, size = 0x18000, scoped, tag = 'input window, operand 2, single buffered']
    #allocation3 [shape = 's32[1]{0}', space=sflag, size = 0x4, scoped, tag = 'scoped memory for euler_forward.1']
    #allocation4 [shape = 'u8[98304]{0}', space=vmem, size = 0x18000, scoped, tag = 'input window, operand 3, single buffered']
    #allocation5 [shape = 's32[1]{0}', space=sflag, size = 0x4, scoped, tag = 'scoped memory for euler_forward.1']
    %11 = vsyncpa [#allocation3], 0
    %12 = vsyncpa [#allocation5], 0
    // Predicated region
    $region2: #{euler_forward.1} parent=1 // pred_check
      _
    $region3: #{euler_forward.1} parent=1 // pred_check_branch
      %14 = sbr.rel (0) target = $region5
    $region4: #{euler_forward.1} parent=1 // pred_region
      _
    $region5: #{euler_forward.1} parent=1 // pred_fallthru
      _
    // Predicated region
    $region6: #{euler_forward.1} parent=1 // pred_check
      _
    $region7: #{euler_forward.1} parent=1 // pred_check_branch
      %16 = sbr.rel (0) target = $region9
    $region8: #{euler_forward.1} parent=1 // pred_region
      _
    $region9: #{euler_forward.1} parent=1 // pred_fallthru
      _
    // Predicated region
    $region10: #{euler_forward.1} parent=1 // pred_check
      _
    $region11: #{euler_forward.1} parent=1 // pred_check_branch
      %18 = sbr.rel (0) target = $region13
    $region12: #{euler_forward.1} parent=1 // pred_region
      %20 = vsyncadd [#allocation3], 0
      %s21 = sshll.u32 %s2, 4
      %s22 = int_to_ptr.hbm [resolvable:$true] %s21
      %s23 = sshll.u32 [#allocation2], 4
      %s24 = int_to_ptr.vmem [resolvable:$true] %s23
      %29 = dma.hbm_to_vmem [thread:$0]  %s22, 3072, %s24, [#allocation3], 192, 192, 12
    $region13: #{euler_forward.1} parent=1 // pred_fallthru
      _
    // Predicated region
    $region14: #{euler_forward.1} parent=1 // pred_check
      _
    $region15: #{euler_forward.1} parent=1 // pred_check_branch
      %31 = sbr.rel (0) target = $region17
    $region16: #{euler_forward.1} parent=1 // pred_region
      %33 = vsyncadd [#allocation5], 0
      %s34 = sshll.u32 %s3, 4
      %s35 = int_to_ptr.hbm [resolvable:$true] %s34
      %s36 = sshll.u32 [#allocation4], 4
      %s37 = int_to_ptr.vmem [resolvable:$true] %s36
      %42 = dma.hbm_to_vmem [thread:$0]  %s35, 3072, %s37, [#allocation5], 192, 192, 12
    $region17: #{euler_forward.1} parent=1 // pred_fallthru
      _
    // Predicated region
    $region18: #{euler_forward.1} parent=1 // pred_check
      _
    $region19: #{euler_forward.1} parent=1 // pred_check_branch
      %44 = sbr.rel (0) target = $region21
    $region20: #{euler_forward.1} parent=1 // pred_region
      _
    $region21: #{euler_forward.1} parent=1 // pred_fallthru
      _
    // Predicated region
    $region22: #{euler_forward.1} parent=1 // pred_check
      _
    $region23: #{euler_forward.1} parent=1 // pred_check_branch
      %46 = sbr.rel (0) target = $region25
    $region24: #{euler_forward.1} parent=1 // pred_region
      _
    $region25: #{euler_forward.1} parent=1 // pred_fallthru
      _
    // Predicated region
    $region26: #{euler_forward.1} parent=1 // pred_check
      _
    $region27: #{euler_forward.1} parent=1 // pred_check_branch
      %48 = sbr.rel (0) target = $region29
    $region28: #{euler_forward.1} parent=1 // pred_region
      %50 = dma.done [#allocation3], 3072
    $region29: #{euler_forward.1} parent=1 // pred_fallthru
      _
    // Predicated region
    $region30: #{euler_forward.1} parent=1 // pred_check
      _
    $region31: #{euler_forward.1} parent=1 // pred_check_branch
      %52 = sbr.rel (0) target = $region33
    $region32: #{euler_forward.1} parent=1 // pred_region
      %54 = dma.done [#allocation5], 3072
    $region33: #{euler_forward.1} parent=1 // pred_fallthru
      _
    %v55 = vld [vmem:[#allocation2] sm:$0xff]
    %v56 = vld [vmem:[#allocation2 + $0x8] sm:$0xf]
    %v57 = vld [vmem:[#allocation2 + $0xc] sm:$0xff]
    %v58 = vld [vmem:[#allocation2 + $0x14] sm:$0xf]
    %v59 = vld [vmem:[#allocation2 + $0x18] sm:$0xff]
    %v60 = vld [vmem:[#allocation2 + $0x20] sm:$0xf]
    %v61 = vld [vmem:[#allocation2 + $0x24] sm:$0xff]
    %v62 = vld [vmem:[#allocation2 + $0x2c] sm:$0xf]
    %v63 = vld [vmem:[#allocation2 + $0x30] sm:$0xff]
    %v64 = vld [vmem:[#allocation2 + $0x38] sm:$0xf]
    %v65 = vld [vmem:[#allocation2 + $0x3c] sm:$0xff]
    %v66 = vld [vmem:[#allocation2 + $0x44] sm:$0xf]
    %v67 = vld [vmem:[#allocation2 + $0x48] sm:$0xff]
    %v68 = vld [vmem:[#allocation2 + $0x50] sm:$0xf]
    %v69 = vld [vmem:[#allocation2 + $0x54] sm:$0xff]
    %v70 = vld [vmem:[#allocation2 + $0x5c] sm:$0xf]
    %v71 = vld [vmem:[#allocation2 + $0x60] sm:$0xff]
    %v72 = vld [vmem:[#allocation2 + $0x68] sm:$0xf]
    %v73 = vld [vmem:[#allocation2 + $0x6c] sm:$0xff]
    %v74 = vld [vmem:[#allocation2 + $0x74] sm:$0xf]
    %v75 = vld [vmem:[#allocation2 + $0x78] sm:$0xff]
    %v76 = vld [vmem:[#allocation2 + $0x80] sm:$0xf]
    %v77 = vld [vmem:[#allocation2 + $0x84] sm:$0xff]
    %v78 = vld [vmem:[#allocation2 + $0x8c] sm:$0xf]
    %v79 = vld [vmem:[#allocation2 + $0x90] sm:$0xff]
    %v80 = vld [vmem:[#allocation2 + $0x98] sm:$0xf]
    %v81 = vld [vmem:[#allocation2 + $0x9c] sm:$0xff]
    %v82 = vld [vmem:[#allocation2 + $0xa4] sm:$0xf]
    %v83 = vld [vmem:[#allocation2 + $0xa8] sm:$0xff]
    %v84 = vld [vmem:[#allocation2 + $0xb0] sm:$0xf]
    %v85 = vld [vmem:[#allocation2 + $0xb4] sm:$0xff]
    %v86 = vld [vmem:[#allocation2 + $0xbc] sm:$0xf]
    %v87 = vld [vmem:[#allocation4] sm:$0xff]
    %v88 = vld [vmem:[#allocation4 + $0x8] sm:$0xf]
    %v89 = vld [vmem:[#allocation4 + $0xc] sm:$0xff]
    %v90 = vld [vmem:[#allocation4 + $0x14] sm:$0xf]
    %v91 = vld [vmem:[#allocation4 + $0x18] sm:$0xff]
    %v92 = vld [vmem:[#allocation4 + $0x20] sm:$0xf]
    %v93 = vld [vmem:[#allocation4 + $0x24] sm:$0xff]
    %v94 = vld [vmem:[#allocation4 + $0x2c] sm:$0xf]
    %v95 = vld [vmem:[#allocation4 + $0x30] sm:$0xff]
    %v96 = vld [vmem:[#allocation4 + $0x38] sm:$0xf]
    %v97 = vld [vmem:[#allocation4 + $0x3c] sm:$0xff]
    %v98 = vld [vmem:[#allocation4 + $0x44] sm:$0xf]
    %v99 = vld [vmem:[#allocation4 + $0x48] sm:$0xff]
    %v100 = vld [vmem:[#allocation4 + $0x50] sm:$0xf]
    %v101 = vld [vmem:[#allocation4 + $0x54] sm:$0xff]
    %v102 = vld [vmem:[#allocation4 + $0x5c] sm:$0xf]
    %v103 = vld [vmem:[#allocation4 + $0x60] sm:$0xff]
    %v104 = vld [vmem:[#allocation4 + $0x68] sm:$0xf]
    %v105 = vld [vmem:[#allocation4 + $0x6c] sm:$0xff]
    %v106 = vld [vmem:[#allocation4 + $0x74] sm:$0xf]
    %v107 = vld [vmem:[#allocation4 + $0x78] sm:$0xff]
    %v108 = vld [vmem:[#allocation4 + $0x80] sm:$0xf]
    %v109 = vld [vmem:[#allocation4 + $0x84] sm:$0xff]
    %v110 = vld [vmem:[#allocation4 + $0x8c] sm:$0xf]
    %v111 = vld [vmem:[#allocation4 + $0x90] sm:$0xff]
    %v112 = vld [vmem:[#allocation4 + $0x98] sm:$0xf]
    %v113 = vld [vmem:[#allocation4 + $0x9c] sm:$0xff]
    %v114 = vld [vmem:[#allocation4 + $0xa4] sm:$0xf]
    %v115 = vld [vmem:[#allocation4 + $0xa8] sm:$0xff]
    %v116 = vld [vmem:[#allocation4 + $0xb0] sm:$0xf]
    %v117 = vld [vmem:[#allocation4 + $0xb4] sm:$0xff]
    %v118 = vld [vmem:[#allocation4 + $0xbc] sm:$0xf]
    %v119 = vld [vmem:[%s5] sm:$0x1]
    %v120 = vld [vmem:[%s0] sm:$0xff]
    %v121 = vpack.c.bf16 %v120, %v120
    %v122 = vld [vmem:[%s4] sm:$0x7]
    %v124 = vperm.slane %v122, 0
    %v125 = vperm.slane %v122, 1
    %v126 = vperm.slane %v122, 2
    %v162 = vunpack.c.l.b16 %v55
    %v163 = vunpack.c.h.b16 %v55
    %v164 = vunpack.c.l.b16 %v56
    %v165 = vunpack.c.l.b16 %v57
    %v166 = vunpack.c.h.b16 %v57
    %v167 = vunpack.c.l.b16 %v58
    %v168 = vunpack.c.l.b16 %v59
    %v169 = vunpack.c.h.b16 %v59
    %v170 = vunpack.c.l.b16 %v60
    %v171 = vunpack.c.l.b16 %v61
    %v172 = vunpack.c.h.b16 %v61
    %v173 = vunpack.c.l.b16 %v62
    %v174 = vunpack.c.l.b16 %v63
    %v175 = vunpack.c.h.b16 %v63
    %v176 = vunpack.c.l.b16 %v64
    %v177 = vunpack.c.l.b16 %v65
    %v178 = vunpack.c.h.b16 %v65
    %v179 = vunpack.c.l.b16 %v66
    %v180 = vunpack.c.l.b16 %v67
    %v181 = vunpack.c.h.b16 %v67
    %v182 = vunpack.c.l.b16 %v68
    %v183 = vunpack.c.l.b16 %v69
    %v184 = vunpack.c.h.b16 %v69
    %v185 = vunpack.c.l.b16 %v70
    %v186 = vunpack.c.l.b16 %v71
    %v187 = vunpack.c.h.b16 %v71
    %v188 = vunpack.c.l.b16 %v72
    %v189 = vunpack.c.l.b16 %v73
    %v190 = vunpack.c.h.b16 %v73
    %v191 = vunpack.c.l.b16 %v74
    %v192 = vunpack.c.l.b16 %v75
    %v193 = vunpack.c.h.b16 %v75
    %v194 = vunpack.c.l.b16 %v76
    %v195 = vunpack.c.l.b16 %v77
    %v196 = vunpack.c.h.b16 %v77
    %v197 = vunpack.c.l.b16 %v78
    %v198 = vunpack.c.l.b16 %v79
    %v199 = vunpack.c.h.b16 %v79
    %v200 = vunpack.c.l.b16 %v80
    %v201 = vunpack.c.l.b16 %v81
    %v202 = vunpack.c.h.b16 %v81
    %v203 = vunpack.c.l.b16 %v82
    %v204 = vunpack.c.l.b16 %v83
    %v205 = vunpack.c.h.b16 %v83
    %v206 = vunpack.c.l.b16 %v84
    %v207 = vunpack.c.l.b16 %v85
    %v208 = vunpack.c.h.b16 %v85
    %v209 = vunpack.c.l.b16 %v86
    %v210 = vpack.c.b16 %v165, %v162
    %v211 = vpack.c.b16 %v166, %v163
    %v212 = vpack.c.b16 %v167, %v164
    %v213 = vpack.c.b16 %v171, %v168
    %v214 = vpack.c.b16 %v172, %v169
    %v215 = vpack.c.b16 %v173, %v170
    %v216 = vpack.c.b16 %v177, %v174
    %v217 = vpack.c.b16 %v178, %v175
    %v218 = vpack.c.b16 %v179, %v176
    %v219 = vpack.c.b16 %v183, %v180
    %v220 = vpack.c.b16 %v184, %v181
    %v221 = vpack.c.b16 %v185, %v182
    %v222 = vpack.c.b16 %v189, %v186
    %v223 = vpack.c.b16 %v190, %v187
    %v224 = vpack.c.b16 %v191, %v188
    %v225 = vpack.c.b16 %v195, %v192
    %v226 = vpack.c.b16 %v196, %v193
    %v227 = vpack.c.b16 %v197, %v194
    %v228 = vpack.c.b16 %v201, %v198
    %v229 = vpack.c.b16 %v202, %v199
    %v230 = vpack.c.b16 %v203, %v200
    %v231 = vpack.c.b16 %v207, %v204
    %v232 = vpack.c.b16 %v208, %v205
    %v233 = vpack.c.b16 %v209, %v206
    %258 = vmatpush.bf16.msra.mxu0 %v231
    %259 = vmatpush.bf16.msra.mxu0 %v228
    %260 = vmatpush.bf16.msra.mxu0 %v225
    %261 = vmatpush.bf16.msra.mxu0 %v222
    %262 = vmatpush.bf16.msra.mxu0 %v219
    %263 = vmatpush.bf16.msra.mxu0 %v216
    %264 = vmatpush.bf16.msra.mxu0 %v213
    %265 = vmatpush.bf16.msra.mxu0 %v210
    %266 = vmatmul.bf16.gmra.mxu0 %v121
    %v267 = vpop.f32.mrf.mxu0
    %v268 = vadd.f32 %v124, %v267
    %v269 = vpop.f32.mrf.mxu0
    %270 = vdwg.mxu0
    %271 = vmatpush.bf16.msra.mxu0 %v232
    %272 = vmatpush.bf16.msra.mxu0 %v229
    %273 = vmatpush.bf16.msra.mxu0 %v226
    %274 = vmatpush.bf16.msra.mxu0 %v223
    %275 = vmatpush.bf16.msra.mxu0 %v220
    %276 = vmatpush.bf16.msra.mxu0 %v217
    %277 = vmatpush.bf16.msra.mxu0 %v214
    %278 = vmatpush.bf16.msra.mxu0 %v211
    %279 = vmatmul.bf16.gmra.mxu0 %v121
    %v280 = vpop.f32.mrf.mxu0
    %v281 = vadd.f32 %v125, %v280
    %v282 = vpop.f32.mrf.mxu0
    %283 = vdwg.mxu0
    %284 = vmatpush.bf16.msra.mxu0 %v233
    %285 = vmatpush.bf16.msra.mxu0 %v230
    %286 = vmatpush.bf16.msra.mxu0 %v227
    %287 = vmatpush.bf16.msra.mxu0 %v224
    %288 = vmatpush.bf16.msra.mxu0 %v221
    %289 = vmatpush.bf16.msra.mxu0 %v218
    %290 = vmatpush.bf16.msra.mxu0 %v215
    %291 = vmatpush.bf16.msra.mxu0 %v212
    %292 = vmatmul.bf16.gmra.mxu0 %v121
    %v293 = vpop.f32.mrf.mxu0
    %v294 = vadd.f32 %v126, %v293
    %v295 = vpop.f32.mrf.mxu0
    %296 = vdwg.mxu0
    %v297 = vld [vmem:[%s1] sm:$0x1]
    %v298 = vpack.c.bf16 %v297, %v297
    %v331 = vunpack.c.l.b16 %v87
    %v332 = vunpack.c.h.b16 %v87
    %v333 = vunpack.c.l.b16 %v88
    %v334 = vunpack.c.l.b16 %v89
    %v335 = vunpack.c.h.b16 %v89
    %v336 = vunpack.c.l.b16 %v90
    %v337 = vunpack.c.l.b16 %v91
    %v338 = vunpack.c.h.b16 %v91
    %v339 = vunpack.c.l.b16 %v92
    %v340 = vunpack.c.l.b16 %v93
    %v341 = vunpack.c.h.b16 %v93
    %v342 = vunpack.c.l.b16 %v94
    %v343 = vunpack.c.l.b16 %v95
    %v344 = vunpack.c.h.b16 %v95
    %v345 = vunpack.c.l.b16 %v96
    %v346 = vunpack.c.l.b16 %v97
    %v347 = vunpack.c.h.b16 %v97
    %v348 = vunpack.c.l.b16 %v98
    %v349 = vunpack.c.l.b16 %v99
    %v350 = vunpack.c.h.b16 %v99
    %v351 = vunpack.c.l.b16 %v100
    %v352 = vunpack.c.l.b16 %v101
    %v353 = vunpack.c.h.b16 %v101
    %v354 = vunpack.c.l.b16 %v102
    %v355 = vunpack.c.l.b16 %v103
    %v356 = vunpack.c.h.b16 %v103
    %v357 = vunpack.c.l.b16 %v104
    %v358 = vunpack.c.l.b16 %v105
    %v359 = vunpack.c.h.b16 %v105
    %v360 = vunpack.c.l.b16 %v106
    %v361 = vunpack.c.l.b16 %v107
    %v362 = vunpack.c.h.b16 %v107
    %v363 = vunpack.c.l.b16 %v108
    %v364 = vunpack.c.l.b16 %v109
    %v365 = vunpack.c.h.b16 %v109
    %v366 = vunpack.c.l.b16 %v110
    %v367 = vunpack.c.l.b16 %v111
    %v368 = vunpack.c.h.b16 %v111
    %v369 = vunpack.c.l.b16 %v112
    %v370 = vunpack.c.l.b16 %v113
    %v371 = vunpack.c.h.b16 %v113
    %v372 = vunpack.c.l.b16 %v114
    %v373 = vunpack.c.l.b16 %v115
    %v374 = vunpack.c.h.b16 %v115
    %v375 = vunpack.c.l.b16 %v116
    %v376 = vunpack.c.l.b16 %v117
    %v377 = vunpack.c.h.b16 %v117
    %v378 = vunpack.c.l.b16 %v118
    %v379 = vpack.c.b16 %v334, %v331
    %v380 = vpack.c.b16 %v335, %v332
    %v381 = vpack.c.b16 %v336, %v333
    %v382 = vpack.c.b16 %v340, %v337
    %v383 = vpack.c.b16 %v341, %v338
    %v384 = vpack.c.b16 %v342, %v339
    %v385 = vpack.c.b16 %v346, %v343
    %v386 = vpack.c.b16 %v347, %v344
    %v387 = vpack.c.b16 %v348, %v345
    %v388 = vpack.c.b16 %v352, %v349
    %v389 = vpack.c.b16 %v353, %v350
    %v390 = vpack.c.b16 %v354, %v351
    %v391 = vpack.c.b16 %v358, %v355
    %v392 = vpack.c.b16 %v359, %v356
    %v393 = vpack.c.b16 %v360, %v357
    %v394 = vpack.c.b16 %v364, %v361
    %v395 = vpack.c.b16 %v365, %v362
    %v396 = vpack.c.b16 %v366, %v363
    %v397 = vpack.c.b16 %v370, %v367
    %v398 = vpack.c.b16 %v371, %v368
    %v399 = vpack.c.b16 %v372, %v369
    %v400 = vpack.c.b16 %v376, %v373
    %v401 = vpack.c.b16 %v377, %v374
    %v402 = vpack.c.b16 %v378, %v375
    %427 = vmatpush.bf16.msra.mxu0 %v400
    %428 = vmatpush.bf16.msra.mxu0 %v397
    %429 = vmatpush.bf16.msra.mxu0 %v394
    %430 = vmatpush.bf16.msra.mxu0 %v391
    %431 = vmatpush.bf16.msra.mxu0 %v388
    %432 = vmatpush.bf16.msra.mxu0 %v385
    %433 = vmatpush.bf16.msra.mxu0 %v382
    %434 = vmatpush.bf16.msra.mxu0 %v379
    %435 = vmatmul.bf16.gmra.mxu0 %v298
    %v436 = vpop.f32.mrf.mxu0
    %v437 = vadd.f32 0.0, %v436
    %v438 = vpop.f32.mrf.mxu0
    %439 = vdwg.mxu0
    %440 = vmatpush.bf16.msra.mxu0 %v401
    %441 = vmatpush.bf16.msra.mxu0 %v398
    %442 = vmatpush.bf16.msra.mxu0 %v395
    %443 = vmatpush.bf16.msra.mxu0 %v392
    %444 = vmatpush.bf16.msra.mxu0 %v389
    %445 = vmatpush.bf16.msra.mxu0 %v386
    %446 = vmatpush.bf16.msra.mxu0 %v383
    %447 = vmatpush.bf16.msra.mxu0 %v380
    %448 = vmatmul.bf16.gmra.mxu0 %v298
    %v449 = vpop.f32.mrf.mxu0
    %v450 = vadd.f32 0.0, %v449
    %v451 = vpop.f32.mrf.mxu0
    %452 = vdwg.mxu0
    %453 = vmatpush.bf16.msra.mxu0 %v402
    %454 = vmatpush.bf16.msra.mxu0 %v399
    %455 = vmatpush.bf16.msra.mxu0 %v396
    %456 = vmatpush.bf16.msra.mxu0 %v393
    %457 = vmatpush.bf16.msra.mxu0 %v390
    %458 = vmatpush.bf16.msra.mxu0 %v387
    %459 = vmatpush.bf16.msra.mxu0 %v384
    %460 = vmatpush.bf16.msra.mxu0 %v381
    %461 = vmatmul.bf16.gmra.mxu0 %v298
    %v462 = vpop.f32.mrf.mxu0
    %v463 = vadd.f32 0.0, %v462
    %v464 = vpop.f32.mrf.mxu0
    %465 = vdwg.mxu0
    %v466 = vadd.f32 %v268, %v437
    %v467 = vxor.u32 %v466, 2147483648
    %v468 = vmul.f32 %v467, 1.442695
    %v469 = vpow.pop %v468
    %v470 = vadd.f32 %v469, 1.0
    %v471 = vrcp.pop %v470
    %v472 = vmul.f32 %v470, %v471
    %v473 = vsub.f32 1.0, %v472
    %v474 = vmul.f32 %v471, %v473
    %v475 = vadd.f32 %v471, %v474
    %vm476 = vweird.f32 %v470
    %vm477 = vweird.f32 %v471
    %vm478 = vmor %vm476, %vm477
    %v479 = vsel %vm478, %v471, %v475
    %v480 = vand.u32 2147483647, %v470
    %vm481 = vcmp.eq.f32.partialorder %v480, 8.507059e+37
    %v482 = vand.u32 %v470, 2147483648
    %v483 = vor.u32 1.1754944e-38, %v482
    %v484 = vsel %vm481, %v483, %v479
    %v485 = vmul.f32 1.0, %v484
    %v486 = vadd.f32 %v281, %v450
    %v487 = vxor.u32 %v486, 2147483648
    %v488 = vmul.f32 %v487, 1.442695
    %v489 = vpow.pop %v488
    %v490 = vadd.f32 %v489, 1.0
    %v491 = vrcp.pop %v490
    %v492 = vmul.f32 %v490, %v491
    %v493 = vsub.f32 1.0, %v492
    %v494 = vmul.f32 %v491, %v493
    %v495 = vadd.f32 %v491, %v494
    %vm496 = vweird.f32 %v490
    %vm497 = vweird.f32 %v491
    %vm498 = vmor %vm496, %vm497
    %v499 = vsel %vm498, %v491, %v495
    %v500 = vand.u32 2147483647, %v490
    %vm501 = vcmp.eq.f32.partialorder %v500, 8.507059e+37
    %v502 = vand.u32 %v490, 2147483648
    %v503 = vor.u32 1.1754944e-38, %v502
    %v504 = vsel %vm501, %v503, %v499
    %v505 = vmul.f32 1.0, %v504
    %v506 = vadd.f32 %v463, %v119
    %v507 = vmul.f32 %v485, %v506
    %v508 = vadd.f32 %v294, %v507
    %v509 = vtanh.pop %v508
    %v510 = vsub.f32 1.0, %v505
    %v511 = vmul.f32 %v510, %v509
    %v512 = vmul.f32 %v505, %v297
    %v513 = vadd.f32 %v511, %v512
    %514 = vst [vmem:[%s6] sm:$0x1] %v513
    %v515 = vpack.c.bf16 %v513, %v513
    %516 = vmatpush.bf16.msra.mxu0 %v400
    %517 = vmatpush.bf16.msra.mxu0 %v397
    %518 = vmatpush.bf16.msra.mxu0 %v394
    %519 = vmatpush.bf16.msra.mxu0 %v391
    %520 = vmatpush.bf16.msra.mxu0 %v388
    %521 = vmatpush.bf16.msra.mxu0 %v385
    %522 = vmatpush.bf16.msra.mxu0 %v382
    %523 = vmatpush.bf16.msra.mxu0 %v379
    %524 = vmatmul.bf16.gmra.mxu0 %v515
    %v525 = vpop.f32.mrf.mxu0
    %v526 = vadd.f32 0.0, %v525
    %v527 = vpop.f32.mrf.mxu0
    %528 = vdwg.mxu0
    %529 = vmatpush.bf16.msra.mxu0 %v401
    %530 = vmatpush.bf16.msra.mxu0 %v398
    %531 = vmatpush.bf16.msra.mxu0 %v395
    %532 = vmatpush.bf16.msra.mxu0 %v392
    %533 = vmatpush.bf16.msra.mxu0 %v389
    %534 = vmatpush.bf16.msra.mxu0 %v386
    %535 = vmatpush.bf16.msra.mxu0 %v383
    %536 = vmatpush.bf16.msra.mxu0 %v380
    %537 = vmatmul.bf16.gmra.mxu0 %v515
    %v538 = vpop.f32.mrf.mxu0
    %v539 = vadd.f32 0.0, %v538
    %v540 = vpop.f32.mrf.mxu0
    %541 = vdwg.mxu0
    %542 = vmatpush.bf16.msra.mxu0 %v402
    %543 = vmatpush.bf16.msra.mxu0 %v399
    %544 = vmatpush.bf16.msra.mxu0 %v396
    %545 = vmatpush.bf16.msra.mxu0 %v393
    %546 = vmatpush.bf16.msra.mxu0 %v390
    %547 = vmatpush.bf16.msra.mxu0 %v387
    %548 = vmatpush.bf16.msra.mxu0 %v384
    %549 = vmatpush.bf16.msra.mxu0 %v381
    %550 = vmatmul.bf16.gmra.mxu0 %v515
    %v551 = vpop.f32.mrf.mxu0
    %v552 = vadd.f32 0.0, %v551
    %v553 = vpop.f32.mrf.mxu0
    %554 = vdwg.mxu0
    %v556 = vrot.slane %v526, 7
    %v558 = vadd.f32 %v268, %v556
    %v559 = vxor.u32 %v558, 2147483648
    %v560 = vmul.f32 %v559, 1.442695
    %v561 = vpow.pop %v560
    %v562 = vadd.f32 %v561, 1.0
    %v563 = vrcp.pop %v562
    %v564 = vmul.f32 %v562, %v563
    %v565 = vsub.f32 1.0, %v564
    %v566 = vmul.f32 %v563, %v565
    %v567 = vadd.f32 %v563, %v566
    %vm568 = vweird.f32 %v562
    %vm569 = vweird.f32 %v563
    %vm570 = vmor %vm568, %vm569
    %v571 = vsel %vm570, %v563, %v567
    %v572 = vand.u32 2147483647, %v562
    %vm573 = vcmp.eq.f32.partialorder %v572, 8.507059e+37
    %v574 = vand.u32 %v562, 2147483648
    %v575 = vor.u32 1.1754944e-38, %v574
    %v576 = vsel %vm573, %v575, %v571
    %v577 = vmul.f32 1.0, %v576
    %v579 = vrot.slane %v539, 7
    %v581 = vadd.f32 %v281, %v579
    %v582 = vxor.u32 %v581, 2147483648
    %v583 = vmul.f32 %v582, 1.442695
    %v584 = vpow.pop %v583
    %v585 = vadd.f32 %v584, 1.0
    %v586 = vrcp.pop %v585
    %v587 = vmul.f32 %v585, %v586
    %v588 = vsub.f32 1.0, %v587
    %v589 = vmul.f32 %v586, %v588
    %v590 = vadd.f32 %v586, %v589
    %vm591 = vweird.f32 %v585
    %vm592 = vweird.f32 %v586
    %vm593 = vmor %vm591, %vm592
    %v594 = vsel %vm593, %v586, %v590
    %v595 = vand.u32 2147483647, %v585
    %vm596 = vcmp.eq.f32.partialorder %v595, 8.507059e+37
    %v597 = vand.u32 %v585, 2147483648
    %v598 = vor.u32 1.1754944e-38, %v597
    %v599 = vsel %vm596, %v598, %v594
    %v600 = vmul.f32 1.0, %v599
    %v601 = vadd.f32 %v552, %v119
    %v603 = vrot.slane %v601, 7
    %v605 = vmul.f32 %v577, %v603
    %v606 = vadd.f32 %v294, %v605
    %v607 = vtanh.pop %v606
    %v608 = vsub.f32 1.0, %v600
    %v609 = vmul.f32 %v608, %v607
    %v611 = vrot.slane %v513, 7
    %v613 = vmul.f32 %v600, %v611
    %v614 = vadd.f32 %v609, %v613
    %615 = vst [vmem:[%s6] sm:$0x2] %v614
    %v616 = vpack.c.bf16 %v614, %v614
    %v618 = vshrl.u32 %v616, 16
    %621 = vmatpush.bf16.msra.mxu0 %v400
    %622 = vmatpush.bf16.msra.mxu0 %v397
    %623 = vmatpush.bf16.msra.mxu0 %v394
    %624 = vmatpush.bf16.msra.mxu0 %v391
    %625 = vmatpush.bf16.msra.mxu0 %v388
    %626 = vmatpush.bf16.msra.mxu0 %v385
    %627 = vmatpush.bf16.msra.mxu0 %v382
    %628 = vmatpush.bf16.msra.mxu0 %v379
    %629 = vmatmul.bf16.gmra.mxu0 %v618
    %v630 = vpop.f32.mrf.mxu0
    %v631 = vadd.f32 0.0, %v630
    %v632 = vpop.f32.mrf.mxu0
    %633 = vdwg.mxu0
    %634 = vmatpush.bf16.msra.mxu0 %v401
    %635 = vmatpush.bf16.msra.mxu0 %v398
    %636 = vmatpush.bf16.msra.mxu0 %v395
    %637 = vmatpush.bf16.msra.mxu0 %v392
    %638 = vmatpush.bf16.msra.mxu0 %v389
    %639 = vmatpush.bf16.msra.mxu0 %v386
    %640 = vmatpush.bf16.msra.mxu0 %v383
    %641 = vmatpush.bf16.msra.mxu0 %v380
    %642 = vmatmul.bf16.gmra.mxu0 %v618
    %v643 = vpop.f32.mrf.mxu0
    %v644 = vadd.f32 0.0, %v643
    %v645 = vpop.f32.mrf.mxu0
    %646 = vdwg.mxu0
    %647 = vmatpush.bf16.msra.mxu0 %v402
    %648 = vmatpush.bf16.msra.mxu0 %v399
    %649 = vmatpush.bf16.msra.mxu0 %v396
    %650 = vmatpush.bf16.msra.mxu0 %v393
    %651 = vmatpush.bf16.msra.mxu0 %v390
    %652 = vmatpush.bf16.msra.mxu0 %v387
    %653 = vmatpush.bf16.msra.mxu0 %v384
    %654 = vmatpush.bf16.msra.mxu0 %v381
    %655 = vmatmul.bf16.gmra.mxu0 %v618
    %v656 = vpop.f32.mrf.mxu0
    %v657 = vadd.f32 0.0, %v656
    %v658 = vpop.f32.mrf.mxu0
    %659 = vdwg.mxu0
    %v661 = vrot.slane %v631, 6
    %v663 = vadd.f32 %v268, %v661
    %v664 = vxor.u32 %v663, 2147483648
    %v665 = vmul.f32 %v664, 1.442695
    %v666 = vpow.pop %v665
    %v667 = vadd.f32 %v666, 1.0
    %v668 = vrcp.pop %v667
    %v669 = vmul.f32 %v667, %v668
    %v670 = vsub.f32 1.0, %v669
    %v671 = vmul.f32 %v668, %v670
    %v672 = vadd.f32 %v668, %v671
    %vm673 = vweird.f32 %v667
    %vm674 = vweird.f32 %v668
    %vm675 = vmor %vm673, %vm674
    %v676 = vsel %vm675, %v668, %v672
    %v677 = vand.u32 2147483647, %v667
    %vm678 = vcmp.eq.f32.partialorder %v677, 8.507059e+37
    %v679 = vand.u32 %v667, 2147483648
    %v680 = vor.u32 1.1754944e-38, %v679
    %v681 = vsel %vm678, %v680, %v676
    %v682 = vmul.f32 1.0, %v681
    %v684 = vrot.slane %v644, 6
    %v686 = vadd.f32 %v281, %v684
    %v687 = vxor.u32 %v686, 2147483648
    %v688 = vmul.f32 %v687, 1.442695
    %v689 = vpow.pop %v688
    %v690 = vadd.f32 %v689, 1.0
    %v691 = vrcp.pop %v690
    %v692 = vmul.f32 %v690, %v691
    %v693 = vsub.f32 1.0, %v692
    %v694 = vmul.f32 %v691, %v693
    %v695 = vadd.f32 %v691, %v694
    %vm696 = vweird.f32 %v690
    %vm697 = vweird.f32 %v691
    %vm698 = vmor %vm696, %vm697
    %v699 = vsel %vm698, %v691, %v695
    %v700 = vand.u32 2147483647, %v690
    %vm701 = vcmp.eq.f32.partialorder %v700, 8.507059e+37
    %v702 = vand.u32 %v690, 2147483648
    %v703 = vor.u32 1.1754944e-38, %v702
    %v704 = vsel %vm701, %v703, %v699
    %v705 = vmul.f32 1.0, %v704
    %v706 = vadd.f32 %v657, %v119
    %v708 = vrot.slane %v706, 6
    %v710 = vmul.f32 %v682, %v708
    %v711 = vadd.f32 %v294, %v710
    %v712 = vtanh.pop %v711
    %v713 = vsub.f32 1.0, %v705
    %v714 = vmul.f32 %v713, %v712
    %v716 = vrot.slane %v614, 7
    %v718 = vmul.f32 %v705, %v716
    %v719 = vadd.f32 %v714, %v718
    %720 = vst [vmem:[%s6] sm:$0x4] %v719
    %v721 = vpack.c.bf16 %v719, %v719
    %v723 = vrot.slane %v721, 1
    %725 = vmatpush.bf16.msra.mxu0 %v400
    %726 = vmatpush.bf16.msra.mxu0 %v397
    %727 = vmatpush.bf16.msra.mxu0 %v394
    %728 = vmatpush.bf16.msra.mxu0 %v391
    %729 = vmatpush.bf16.msra.mxu0 %v388
    %730 = vmatpush.bf16.msra.mxu0 %v385
    %731 = vmatpush.bf16.msra.mxu0 %v382
    %732 = vmatpush.bf16.msra.mxu0 %v379
    %733 = vmatmul.bf16.gmra.mxu0 %v723
    %v734 = vpop.f32.mrf.mxu0
    %v735 = vadd.f32 0.0, %v734
    %v736 = vpop.f32.mrf.mxu0
    %737 = vdwg.mxu0
    %738 = vmatpush.bf16.msra.mxu0 %v401
    %739 = vmatpush.bf16.msra.mxu0 %v398
    %740 = vmatpush.bf16.msra.mxu0 %v395
    %741 = vmatpush.bf16.msra.mxu0 %v392
    %742 = vmatpush.bf16.msra.mxu0 %v389
    %743 = vmatpush.bf16.msra.mxu0 %v386
    %744 = vmatpush.bf16.msra.mxu0 %v383
    %745 = vmatpush.bf16.msra.mxu0 %v380
    %746 = vmatmul.bf16.gmra.mxu0 %v723
    %v747 = vpop.f32.mrf.mxu0
    %v748 = vadd.f32 0.0, %v747
    %v749 = vpop.f32.mrf.mxu0
    %750 = vdwg.mxu0
    %751 = vmatpush.bf16.msra.mxu0 %v402
    %752 = vmatpush.bf16.msra.mxu0 %v399
    %753 = vmatpush.bf16.msra.mxu0 %v396
    %754 = vmatpush.bf16.msra.mxu0 %v393
    %755 = vmatpush.bf16.msra.mxu0 %v390
    %756 = vmatpush.bf16.msra.mxu0 %v387
    %757 = vmatpush.bf16.msra.mxu0 %v384
    %758 = vmatpush.bf16.msra.mxu0 %v381
    %759 = vmatmul.bf16.gmra.mxu0 %v723
    %v760 = vpop.f32.mrf.mxu0
    %v761 = vadd.f32 0.0, %v760
    %v762 = vpop.f32.mrf.mxu0
    %763 = vdwg.mxu0
    %v765 = vrot.slane %v735, 5
    %v767 = vadd.f32 %v268, %v765
    %v768 = vxor.u32 %v767, 2147483648
    %v769 = vmul.f32 %v768, 1.442695
    %v770 = vpow.pop %v769
    %v771 = vadd.f32 %v770, 1.0
    %v772 = vrcp.pop %v771
    %v773 = vmul.f32 %v771, %v772
    %v774 = vsub.f32 1.0, %v773
    %v775 = vmul.f32 %v772, %v774
    %v776 = vadd.f32 %v772, %v775
    %vm777 = vweird.f32 %v771
    %vm778 = vweird.f32 %v772
    %vm779 = vmor %vm777, %vm778
    %v780 = vsel %vm779, %v772, %v776
    %v781 = vand.u32 2147483647, %v771
    %vm782 = vcmp.eq.f32.partialorder %v781, 8.507059e+37
    %v783 = vand.u32 %v771, 2147483648
    %v784 = vor.u32 1.1754944e-38, %v783
    %v785 = vsel %vm782, %v784, %v780
    %v786 = vmul.f32 1.0, %v785
    %v788 = vrot.slane %v748, 5
    %v790 = vadd.f32 %v281, %v788
    %v791 = vxor.u32 %v790, 2147483648
    %v792 = vmul.f32 %v791, 1.442695
    %v793 = vpow.pop %v792
    %v794 = vadd.f32 %v793, 1.0
    %v795 = vrcp.pop %v794
    %v796 = vmul.f32 %v794, %v795
    %v797 = vsub.f32 1.0, %v796
    %v798 = vmul.f32 %v795, %v797
    %v799 = vadd.f32 %v795, %v798
    %vm800 = vweird.f32 %v794
    %vm801 = vweird.f32 %v795
    %vm802 = vmor %vm800, %vm801
    %v803 = vsel %vm802, %v795, %v799
    %v804 = vand.u32 2147483647, %v794
    %vm805 = vcmp.eq.f32.partialorder %v804, 8.507059e+37
    %v806 = vand.u32 %v794, 2147483648
    %v807 = vor.u32 1.1754944e-38, %v806
    %v808 = vsel %vm805, %v807, %v803
    %v809 = vmul.f32 1.0, %v808
    %v810 = vadd.f32 %v761, %v119
    %v812 = vrot.slane %v810, 5
    %v814 = vmul.f32 %v786, %v812
    %v815 = vadd.f32 %v294, %v814
    %v816 = vtanh.pop %v815
    %v817 = vsub.f32 1.0, %v809
    %v818 = vmul.f32 %v817, %v816
    %v820 = vrot.slane %v719, 7
    %v822 = vmul.f32 %v809, %v820
    %v823 = vadd.f32 %v818, %v822
    %824 = vst [vmem:[%s6] sm:$0x8] %v823
    %v825 = vpack.c.bf16 %v823, %v823
    %v827 = vshrl.u32 %v825, 16
    %v829 = vrot.slane %v827, 1
    %831 = vmatpush.bf16.msra.mxu0 %v400
    %832 = vmatpush.bf16.msra.mxu0 %v397
    %833 = vmatpush.bf16.msra.mxu0 %v394
    %834 = vmatpush.bf16.msra.mxu0 %v391
    %835 = vmatpush.bf16.msra.mxu0 %v388
    %836 = vmatpush.bf16.msra.mxu0 %v385
    %837 = vmatpush.bf16.msra.mxu0 %v382
    %838 = vmatpush.bf16.msra.mxu0 %v379
    %839 = vmatmul.bf16.gmra.mxu0 %v829
    %v840 = vpop.f32.mrf.mxu0
    %v841 = vadd.f32 0.0, %v840
    %v842 = vpop.f32.mrf.mxu0
    %843 = vdwg.mxu0
    %844 = vmatpush.bf16.msra.mxu0 %v401
    %845 = vmatpush.bf16.msra.mxu0 %v398
    %846 = vmatpush.bf16.msra.mxu0 %v395
    %847 = vmatpush.bf16.msra.mxu0 %v392
    %848 = vmatpush.bf16.msra.mxu0 %v389
    %849 = vmatpush.bf16.msra.mxu0 %v386
    %850 = vmatpush.bf16.msra.mxu0 %v383
    %851 = vmatpush.bf16.msra.mxu0 %v380
    %852 = vmatmul.bf16.gmra.mxu0 %v829
    %v853 = vpop.f32.mrf.mxu0
    %v854 = vadd.f32 0.0, %v853
    %v855 = vpop.f32.mrf.mxu0
    %856 = vdwg.mxu0
    %857 = vmatpush.bf16.msra.mxu0 %v402
    %858 = vmatpush.bf16.msra.mxu0 %v399
    %859 = vmatpush.bf16.msra.mxu0 %v396
    %860 = vmatpush.bf16.msra.mxu0 %v393
    %861 = vmatpush.bf16.msra.mxu0 %v390
    %862 = vmatpush.bf16.msra.mxu0 %v387
    %863 = vmatpush.bf16.msra.mxu0 %v384
    %864 = vmatpush.bf16.msra.mxu0 %v381
    %865 = vmatmul.bf16.gmra.mxu0 %v829
    %v866 = vpop.f32.mrf.mxu0
    %v867 = vadd.f32 0.0, %v866
    %v868 = vpop.f32.mrf.mxu0
    %869 = vdwg.mxu0
    %v871 = vrot.slane %v841, 4
    %v873 = vadd.f32 %v268, %v871
    %v874 = vxor.u32 %v873, 2147483648
    %v875 = vmul.f32 %v874, 1.442695
    %v876 = vpow.pop %v875
    %v877 = vadd.f32 %v876, 1.0
    %v878 = vrcp.pop %v877
    %v879 = vmul.f32 %v877, %v878
    %v880 = vsub.f32 1.0, %v879
    %v881 = vmul.f32 %v878, %v880
    %v882 = vadd.f32 %v878, %v881
    %vm883 = vweird.f32 %v877
    %vm884 = vweird.f32 %v878
    %vm885 = vmor %vm883, %vm884
    %v886 = vsel %vm885, %v878, %v882
    %v887 = vand.u32 2147483647, %v877
    %vm888 = vcmp.eq.f32.partialorder %v887, 8.507059e+37
    %v889 = vand.u32 %v877, 2147483648
    %v890 = vor.u32 1.1754944e-38, %v889
    %v891 = vsel %vm888, %v890, %v886
    %v892 = vmul.f32 1.0, %v891
    %v894 = vrot.slane %v854, 4
    %v896 = vadd.f32 %v281, %v894
    %v897 = vxor.u32 %v896, 2147483648
    %v898 = vmul.f32 %v897, 1.442695
    %v899 = vpow.pop %v898
    %v900 = vadd.f32 %v899, 1.0
    %v901 = vrcp.pop %v900
    %v902 = vmul.f32 %v900, %v901
    %v903 = vsub.f32 1.0, %v902
    %v904 = vmul.f32 %v901, %v903
    %v905 = vadd.f32 %v901, %v904
    %vm906 = vweird.f32 %v900
    %vm907 = vweird.f32 %v901
    %vm908 = vmor %vm906, %vm907
    %v909 = vsel %vm908, %v901, %v905
    %v910 = vand.u32 2147483647, %v900
    %vm911 = vcmp.eq.f32.partialorder %v910, 8.507059e+37
    %v912 = vand.u32 %v900, 2147483648
    %v913 = vor.u32 1.1754944e-38, %v912
    %v914 = vsel %vm911, %v913, %v909
    %v915 = vmul.f32 1.0, %v914
    %v916 = vadd.f32 %v867, %v119
    %v918 = vrot.slane %v916, 4
    %v920 = vmul.f32 %v892, %v918
    %v921 = vadd.f32 %v294, %v920
    %v922 = vtanh.pop %v921
    %v923 = vsub.f32 1.0, %v915
    %v924 = vmul.f32 %v923, %v922
    %v926 = vrot.slane %v823, 7
    %v928 = vmul.f32 %v915, %v926
    %v929 = vadd.f32 %v924, %v928
    %930 = vst [vmem:[%s6] sm:$0x10] %v929
    %v931 = vpack.c.bf16 %v929, %v929
    %v933 = vrot.slane %v931, 2
    %935 = vmatpush.bf16.msra.mxu0 %v400
    %936 = vmatpush.bf16.msra.mxu0 %v397
    %937 = vmatpush.bf16.msra.mxu0 %v394
    %938 = vmatpush.bf16.msra.mxu0 %v391
    %939 = vmatpush.bf16.msra.mxu0 %v388
    %940 = vmatpush.bf16.msra.mxu0 %v385
    %941 = vmatpush.bf16.msra.mxu0 %v382
    %942 = vmatpush.bf16.msra.mxu0 %v379
    %943 = vmatmul.bf16.gmra.mxu0 %v933
    %v944 = vpop.f32.mrf.mxu0
    %v945 = vadd.f32 0.0, %v944
    %v946 = vpop.f32.mrf.mxu0
    %947 = vdwg.mxu0
    %948 = vmatpush.bf16.msra.mxu0 %v401
    %949 = vmatpush.bf16.msra.mxu0 %v398
    %950 = vmatpush.bf16.msra.mxu0 %v395
    %951 = vmatpush.bf16.msra.mxu0 %v392
    %952 = vmatpush.bf16.msra.mxu0 %v389
    %953 = vmatpush.bf16.msra.mxu0 %v386
    %954 = vmatpush.bf16.msra.mxu0 %v383
    %955 = vmatpush.bf16.msra.mxu0 %v380
    %956 = vmatmul.bf16.gmra.mxu0 %v933
    %v957 = vpop.f32.mrf.mxu0
    %v958 = vadd.f32 0.0, %v957
    %v959 = vpop.f32.mrf.mxu0
    %960 = vdwg.mxu0
    %961 = vmatpush.bf16.msra.mxu0 %v402
    %962 = vmatpush.bf16.msra.mxu0 %v399
    %963 = vmatpush.bf16.msra.mxu0 %v396
    %964 = vmatpush.bf16.msra.mxu0 %v393
    %965 = vmatpush.bf16.msra.mxu0 %v390
    %966 = vmatpush.bf16.msra.mxu0 %v387
    %967 = vmatpush.bf16.msra.mxu0 %v384
    %968 = vmatpush.bf16.msra.mxu0 %v381
    %969 = vmatmul.bf16.gmra.mxu0 %v933
    %v970 = vpop.f32.mrf.mxu0
    %v971 = vadd.f32 0.0, %v970
    %v972 = vpop.f32.mrf.mxu0
    %973 = vdwg.mxu0
    %v975 = vrot.slane %v945, 3
    %v977 = vadd.f32 %v268, %v975
    %v978 = vxor.u32 %v977, 2147483648
    %v979 = vmul.f32 %v978, 1.442695
    %v980 = vpow.pop %v979
    %v981 = vadd.f32 %v980, 1.0
    %v982 = vrcp.pop %v981
    %v983 = vmul.f32 %v981, %v982
    %v984 = vsub.f32 1.0, %v983
    %v985 = vmul.f32 %v982, %v984
    %v986 = vadd.f32 %v982, %v985
    %vm987 = vweird.f32 %v981
    %vm988 = vweird.f32 %v982
    %vm989 = vmor %vm987, %vm988
    %v990 = vsel %vm989, %v982, %v986
    %v991 = vand.u32 2147483647, %v981
    %vm992 = vcmp.eq.f32.partialorder %v991, 8.507059e+37
    %v993 = vand.u32 %v981, 2147483648
    %v994 = vor.u32 1.1754944e-38, %v993
    %v995 = vsel %vm992, %v994, %v990
    %v996 = vmul.f32 1.0, %v995
    %v998 = vrot.slane %v958, 3
    %v1000 = vadd.f32 %v281, %v998
    %v1001 = vxor.u32 %v1000, 2147483648
    %v1002 = vmul.f32 %v1001, 1.442695
    %v1003 = vpow.pop %v1002
    %v1004 = vadd.f32 %v1003, 1.0
    %v1005 = vrcp.pop %v1004
    %v1006 = vmul.f32 %v1004, %v1005
    %v1007 = vsub.f32 1.0, %v1006
    %v1008 = vmul.f32 %v1005, %v1007
    %v1009 = vadd.f32 %v1005, %v1008
    %vm1010 = vweird.f32 %v1004
    %vm1011 = vweird.f32 %v1005
    %vm1012 = vmor %vm1010, %vm1011
    %v1013 = vsel %vm1012, %v1005, %v1009
    %v1014 = vand.u32 2147483647, %v1004
    %vm1015 = vcmp.eq.f32.partialorder %v1014, 8.507059e+37
    %v1016 = vand.u32 %v1004, 2147483648
    %v1017 = vor.u32 1.1754944e-38, %v1016
    %v1018 = vsel %vm1015, %v1017, %v1013
    %v1019 = vmul.f32 1.0, %v1018
    %v1020 = vadd.f32 %v971, %v119
    %v1022 = vrot.slane %v1020, 3
    %v1024 = vmul.f32 %v996, %v1022
    %v1025 = vadd.f32 %v294, %v1024
    %v1026 = vtanh.pop %v1025
    %v1027 = vsub.f32 1.0, %v1019
    %v1028 = vmul.f32 %v1027, %v1026
    %v1030 = vrot.slane %v929, 7
    %v1032 = vmul.f32 %v1019, %v1030
    %v1033 = vadd.f32 %v1028, %v1032
    %1034 = vst [vmem:[%s6] sm:$0x20] %v1033
    %v1035 = vpack.c.bf16 %v1033, %v1033
    %v1037 = vshrl.u32 %v1035, 16
    %v1039 = vrot.slane %v1037, 2
    %1041 = vmatpush.bf16.msra.mxu0 %v400
    %1042 = vmatpush.bf16.msra.mxu0 %v397
    %1043 = vmatpush.bf16.msra.mxu0 %v394
    %1044 = vmatpush.bf16.msra.mxu0 %v391
    %1045 = vmatpush.bf16.msra.mxu0 %v388
    %1046 = vmatpush.bf16.msra.mxu0 %v385
    %1047 = vmatpush.bf16.msra.mxu0 %v382
    %1048 = vmatpush.bf16.msra.mxu0 %v379
    %1049 = vmatmul.bf16.gmra.mxu0 %v1039
    %v1050 = vpop.f32.mrf.mxu0
    %v1051 = vadd.f32 0.0, %v1050
    %v1052 = vpop.f32.mrf.mxu0
    %1053 = vdwg.mxu0
    %1054 = vmatpush.bf16.msra.mxu0 %v401
    %1055 = vmatpush.bf16.msra.mxu0 %v398
    %1056 = vmatpush.bf16.msra.mxu0 %v395
    %1057 = vmatpush.bf16.msra.mxu0 %v392
    %1058 = vmatpush.bf16.msra.mxu0 %v389
    %1059 = vmatpush.bf16.msra.mxu0 %v386
    %1060 = vmatpush.bf16.msra.mxu0 %v383
    %1061 = vmatpush.bf16.msra.mxu0 %v380
    %1062 = vmatmul.bf16.gmra.mxu0 %v1039
    %v1063 = vpop.f32.mrf.mxu0
    %v1064 = vadd.f32 0.0, %v1063
    %v1065 = vpop.f32.mrf.mxu0
    %1066 = vdwg.mxu0
    %1067 = vmatpush.bf16.msra.mxu0 %v402
    %1068 = vmatpush.bf16.msra.mxu0 %v399
    %1069 = vmatpush.bf16.msra.mxu0 %v396
    %1070 = vmatpush.bf16.msra.mxu0 %v393
    %1071 = vmatpush.bf16.msra.mxu0 %v390
    %1072 = vmatpush.bf16.msra.mxu0 %v387
    %1073 = vmatpush.bf16.msra.mxu0 %v384
    %1074 = vmatpush.bf16.msra.mxu0 %v381
    %1075 = vmatmul.bf16.gmra.mxu0 %v1039
    %v1076 = vpop.f32.mrf.mxu0
    %v1077 = vadd.f32 0.0, %v1076
    %v1078 = vpop.f32.mrf.mxu0
    %1079 = vdwg.mxu0
    %v1081 = vrot.slane %v1051, 2
    %v1083 = vadd.f32 %v268, %v1081
    %v1084 = vxor.u32 %v1083, 2147483648
    %v1085 = vmul.f32 %v1084, 1.442695
    %v1086 = vpow.pop %v1085
    %v1087 = vadd.f32 %v1086, 1.0
    %v1088 = vrcp.pop %v1087
    %v1089 = vmul.f32 %v1087, %v1088
    %v1090 = vsub.f32 1.0, %v1089
    %v1091 = vmul.f32 %v1088, %v1090
    %v1092 = vadd.f32 %v1088, %v1091
    %vm1093 = vweird.f32 %v1087
    %vm1094 = vweird.f32 %v1088
    %vm1095 = vmor %vm1093, %vm1094
    %v1096 = vsel %vm1095, %v1088, %v1092
    %v1097 = vand.u32 2147483647, %v1087
    %vm1098 = vcmp.eq.f32.partialorder %v1097, 8.507059e+37
    %v1099 = vand.u32 %v1087, 2147483648
    %v1100 = vor.u32 1.1754944e-38, %v1099
    %v1101 = vsel %vm1098, %v1100, %v1096
    %v1102 = vmul.f32 1.0, %v1101
    %v1104 = vrot.slane %v1064, 2
    %v1106 = vadd.f32 %v281, %v1104
    %v1107 = vxor.u32 %v1106, 2147483648
    %v1108 = vmul.f32 %v1107, 1.442695
    %v1109 = vpow.pop %v1108
    %v1110 = vadd.f32 %v1109, 1.0
    %v1111 = vrcp.pop %v1110
    %v1112 = vmul.f32 %v1110, %v1111
    %v1113 = vsub.f32 1.0, %v1112
    %v1114 = vmul.f32 %v1111, %v1113
    %v1115 = vadd.f32 %v1111, %v1114
    %vm1116 = vweird.f32 %v1110
    %vm1117 = vweird.f32 %v1111
    %vm1118 = vmor %vm1116, %vm1117
    %v1119 = vsel %vm1118, %v1111, %v1115
    %v1120 = vand.u32 2147483647, %v1110
    %vm1121 = vcmp.eq.f32.partialorder %v1120, 8.507059e+37
    %v1122 = vand.u32 %v1110, 2147483648
    %v1123 = vor.u32 1.1754944e-38, %v1122
    %v1124 = vsel %vm1121, %v1123, %v1119
    %v1125 = vmul.f32 1.0, %v1124
    %v1126 = vadd.f32 %v1077, %v119
    %v1128 = vrot.slane %v1126, 2
    %v1130 = vmul.f32 %v1102, %v1128
    %v1131 = vadd.f32 %v294, %v1130
    %v1132 = vtanh.pop %v1131
    %v1133 = vsub.f32 1.0, %v1125
    %v1134 = vmul.f32 %v1133, %v1132
    %v1136 = vrot.slane %v1033, 7
    %v1138 = vmul.f32 %v1125, %v1136
    %v1139 = vadd.f32 %v1134, %v1138
    %1140 = vst [vmem:[%s6] sm:$0x40] %v1139
    %v1141 = vpack.c.bf16 %v1139, %v1139
    %v1143 = vrot.slane %v1141, 3
    %1145 = vmatpush.bf16.msra.mxu0 %v400
    %1146 = vmatpush.bf16.msra.mxu0 %v397
    %1147 = vmatpush.bf16.msra.mxu0 %v394
    %1148 = vmatpush.bf16.msra.mxu0 %v391
    %1149 = vmatpush.bf16.msra.mxu0 %v388
    %1150 = vmatpush.bf16.msra.mxu0 %v385
    %1151 = vmatpush.bf16.msra.mxu0 %v382
    %1152 = vmatpush.bf16.msra.mxu0 %v379
    %1153 = vmatmul.bf16.gmra.mxu0 %v1143
    %v1154 = vpop.f32.mrf.mxu0
    %v1155 = vadd.f32 0.0, %v1154
    %v1156 = vpop.f32.mrf.mxu0
    %1157 = vdwg.mxu0
    %1158 = vmatpush.bf16.msra.mxu0 %v401
    %1159 = vmatpush.bf16.msra.mxu0 %v398
    %1160 = vmatpush.bf16.msra.mxu0 %v395
    %1161 = vmatpush.bf16.msra.mxu0 %v392
    %1162 = vmatpush.bf16.msra.mxu0 %v389
    %1163 = vmatpush.bf16.msra.mxu0 %v386
    %1164 = vmatpush.bf16.msra.mxu0 %v383
    %1165 = vmatpush.bf16.msra.mxu0 %v380
    %1166 = vmatmul.bf16.gmra.mxu0 %v1143
    %v1167 = vpop.f32.mrf.mxu0
    %v1168 = vadd.f32 0.0, %v1167
    %v1169 = vpop.f32.mrf.mxu0
    %1170 = vdwg.mxu0
    %1171 = vmatpush.bf16.msra.mxu0 %v402
    %1172 = vmatpush.bf16.msra.mxu0 %v399
    %1173 = vmatpush.bf16.msra.mxu0 %v396
    %1174 = vmatpush.bf16.msra.mxu0 %v393
    %1175 = vmatpush.bf16.msra.mxu0 %v390
    %1176 = vmatpush.bf16.msra.mxu0 %v387
    %1177 = vmatpush.bf16.msra.mxu0 %v384
    %1178 = vmatpush.bf16.msra.mxu0 %v381
    %1179 = vmatmul.bf16.gmra.mxu0 %v1143
    %v1180 = vpop.f32.mrf.mxu0
    %v1181 = vadd.f32 0.0, %v1180
    %v1182 = vpop.f32.mrf.mxu0
    %1183 = vdwg.mxu0
    %v1185 = vrot.slane %v1155, 1
    %v1187 = vadd.f32 %v268, %v1185
    %v1188 = vxor.u32 %v1187, 2147483648
    %v1189 = vmul.f32 %v1188, 1.442695
    %v1190 = vpow.pop %v1189
    %v1191 = vadd.f32 %v1190, 1.0
    %v1192 = vrcp.pop %v1191
    %v1193 = vmul.f32 %v1191, %v1192
    %v1194 = vsub.f32 1.0, %v1193
    %v1195 = vmul.f32 %v1192, %v1194
    %v1196 = vadd.f32 %v1192, %v1195
    %vm1197 = vweird.f32 %v1191
    %vm1198 = vweird.f32 %v1192
    %vm1199 = vmor %vm1197, %vm1198
    %v1200 = vsel %vm1199, %v1192, %v1196
    %v1201 = vand.u32 2147483647, %v1191
    %vm1202 = vcmp.eq.f32.partialorder %v1201, 8.507059e+37
    %v1203 = vand.u32 %v1191, 2147483648
    %v1204 = vor.u32 1.1754944e-38, %v1203
    %v1205 = vsel %vm1202, %v1204, %v1200
    %v1206 = vmul.f32 1.0, %v1205
    %v1208 = vrot.slane %v1168, 1
    %v1210 = vadd.f32 %v281, %v1208
    %v1211 = vxor.u32 %v1210, 2147483648
    %v1212 = vmul.f32 %v1211, 1.442695
    %v1213 = vpow.pop %v1212
    %v1214 = vadd.f32 %v1213, 1.0
    %v1215 = vrcp.pop %v1214
    %v1216 = vmul.f32 %v1214, %v1215
    %v1217 = vsub.f32 1.0, %v1216
    %v1218 = vmul.f32 %v1215, %v1217
    %v1219 = vadd.f32 %v1215, %v1218
    %vm1220 = vweird.f32 %v1214
    %vm1221 = vweird.f32 %v1215
    %vm1222 = vmor %vm1220, %vm1221
    %v1223 = vsel %vm1222, %v1215, %v1219
    %v1224 = vand.u32 2147483647, %v1214
    %vm1225 = vcmp.eq.f32.partialorder %v1224, 8.507059e+37
    %v1226 = vand.u32 %v1214, 2147483648
    %v1227 = vor.u32 1.1754944e-38, %v1226
    %v1228 = vsel %vm1225, %v1227, %v1223
    %v1229 = vmul.f32 1.0, %v1228
    %v1230 = vadd.f32 %v1181, %v119
    %v1232 = vrot.slane %v1230, 1
    %v1234 = vmul.f32 %v1206, %v1232
    %v1235 = vadd.f32 %v294, %v1234
    %v1236 = vtanh.pop %v1235
    %v1237 = vsub.f32 1.0, %v1229
    %v1238 = vmul.f32 %v1237, %v1236
    %v1240 = vrot.slane %v1139, 7
    %v1242 = vmul.f32 %v1229, %v1240
    %v1243 = vadd.f32 %v1238, %v1242
    %1244 = vst [vmem:[%s6] sm:$0x80] %v1243
    // Predicated region
    $region34: #{euler_forward.1} parent=1 // pred_check
      _
    $region35: #{euler_forward.1} parent=1 // pred_check_branch
      %1246 = sbr.rel (0) target = $region37
    $region36: #{euler_forward.1} parent=1 // pred_region
      _
    $region37: #{euler_forward.1} parent=1 // pred_fallthru
      _
    // Predicated region
    $region38: #{euler_forward.1} parent=1 // pred_check
      _
    $region39: #{euler_forward.1} parent=1 // pred_check_branch
      %1248 = sbr.rel (0) target = $region41
    $region40: #{euler_forward.1} parent=1 // pred_region
      _
    $region41: #{euler_forward.1} parent=1 // pred_fallthru
      _
    %1249 = vsyncpa [#allocation3], 1
    %1250 = vsyncpa [#allocation5], 1

</llo_original>
